<compile_context>
chip_gen: v5e
topology: v5e:2x2
jax: 0.10.0
libtpu: 0.0.40
codegen_flags: <defaults>
</compile_context>

<pallas_src>
import functools

import jax
import jax.numpy as jnp
from jax.experimental import pallas as pl
from jax.experimental.pallas import tpu as pltpu


def mlp_kernel(x_ref,
               w1_ref, b1_ref,
               w2_ref, b2_ref,
               w3_ref, b3_ref,
               w4_ref, b4_ref,
               o_ref):
    # Cast x f32 -> bf16 on the VPU (free filler under the MXU-bound matmuls).
    x = x_ref[...].astype(jnp.bfloat16)

    # layer_input: (TB, dim_in) @ (dim_in, 512) + bias, ReLU
    h = jnp.dot(x, w1_ref[...], preferred_element_type=jnp.float32)
    h = jnp.maximum(h + b1_ref[...], 0.0).astype(jnp.bfloat16)

    # layer_hidden1: (TB, 512) @ (512, 256) + bias, ReLU
    h = jnp.dot(h, w2_ref[...], preferred_element_type=jnp.float32)
    h = jnp.maximum(h + b2_ref[...], 0.0).astype(jnp.bfloat16)

    # layer_hidden2 (lane-padded 64 -> 128): (TB, 256) @ (256, 128) + bias, ReLU
    h = jnp.dot(h, w3_ref[...], preferred_element_type=jnp.float32)
    h = jnp.maximum(h + b3_ref[...], 0.0).astype(jnp.bfloat16)

    # layer_out: (TB, 128) @ (128, DOUT_PAD) + bias (padded cols: bias = -1e30)
    logits = jnp.dot(h, w4_ref[...], preferred_element_type=jnp.float32)
    logits = logits + b4_ref[...]

    # softmax over the feature axis in f32 (padded columns -> exp(~-1e30) == 0)
    m = jnp.max(logits, axis=-1, keepdims=True)
    e = jnp.exp(logits - m)
    denom = jnp.sum(e, axis=-1, keepdims=True)
    o_ref[...] = (e * pl.reciprocal(denom, approx=False)).astype(o_ref.dtype)


def init_params(key, dim_in, dim_out):
    """PyTorch-style Linear init (uniform +-1/sqrt(fan_in)).
    Weights stored as (in, out) = transpose of torch's (out, in)."""
    dims = [(dim_in, 512), (512, 256), (256, 64), (64, dim_out)]
    params = []
    for (fan_in, fan_out) in dims:
        key, kw, kb = jax.random.split(key, 3)
        bound = 1.0 / (fan_in ** 0.5)
        w = jax.random.uniform(kw, (fan_in, fan_out), jnp.float32, -bound, bound)
        b = jax.random.uniform(kb, (1, fan_out), jnp.float32, -bound, bound)
        params += [w, b]
    return params


@functools.partial(jax.jit, static_argnames=("dim_out", "max_tb"))
def mlp_forward(x_nchw, params, dim_out, max_tb=512):
    B = x_nchw.shape[0]
    dim_in = x_nchw.shape[1] * x_nchw.shape[-2] * x_nchw.shape[-1]
    x_flat = x_nchw.reshape(B, dim_in).astype(jnp.float32)  # torch x.view(-1, C*H*W)

    # Batch tile: multiple of 16 (bf16 sublane packing), capped at max_tb.
    # If B > 16, also cap TB so the batch grid has >= 2 steps (v7x: 2 TCs).
    TB = min(max_tb, ((B + 15) // 16) * 16)
    if B > 16:
        TB = min(TB, ((-(-B // 2) + 15) // 16) * 16)
    Bp = pl.cdiv(B, TB) * TB
    if Bp != B:
        x_flat = jnp.pad(x_flat, ((0, Bp - B), (0, 0)))

    w1, b1, w2, b2, w3, b3, w4, b4 = params

    # Lane-pad layer 3 output to 128 (zero cols/bias -> no numerical change)
    # and pad layer 4 rows/cols to match.
    H3 = 128
    w3p = jnp.pad(w3, ((0, 0), (0, H3 - w3.shape[1])))
    b3p = jnp.pad(b3, ((0, 0), (0, H3 - b3.shape[1])))

    DOUT_PAD = ((dim_out + 127) // 128) * 128
    w4p = jnp.pad(w4, ((0, H3 - w4.shape[0]), (0, DOUT_PAD - dim_out)))
    b4p = jnp.pad(b4, ((0, 0), (0, DOUT_PAD - dim_out)), constant_values=-1e30)

    # bf16 weights (MXU-native); biases stay f32 (b4p MUST stay f32 for -1e30).
    w1b = w1.astype(jnp.bfloat16)
    w2b = w2.astype(jnp.bfloat16)
    w3b = w3p.astype(jnp.bfloat16)
    w4b = w4p.astype(jnp.bfloat16)

    grid = (Bp // TB,)
    const2 = lambda i: (0, 0)   # weights/biases: same block every step (VMEM-resident)

    in_specs = [
        pl.BlockSpec((TB, dim_in), lambda i: (i, 0)),     # x: tiled over batch (f32)
        pl.BlockSpec((dim_in, 512), const2),
        pl.BlockSpec((1, 512), const2),
        pl.BlockSpec((512, 256), const2),
        pl.BlockSpec((1, 256), const2),
        pl.BlockSpec((256, H3), const2),
        pl.BlockSpec((1, H3), const2),
        pl.BlockSpec((H3, DOUT_PAD), const2),
        pl.BlockSpec((1, DOUT_PAD), const2),
    ]
    out_spec = pl.BlockSpec((TB, DOUT_PAD), lambda i: (i, 0))

    flops = 2 * Bp * (dim_in * 512 + 512 * 256 + 256 * H3 + H3 * DOUT_PAD)
    weight_bytes = 2 * (dim_in * 512 + 512 * 256 + 256 * H3 + H3 * DOUT_PAD)
    bytes_accessed = weight_bytes + Bp * dim_in * 4 + Bp * DOUT_PAD * 2

    out = pl.pallas_call(
        mlp_kernel,
        out_shape=jax.ShapeDtypeStruct((Bp, DOUT_PAD), jnp.bfloat16),
        grid=grid,
        in_specs=in_specs,
        out_specs=out_spec,
        compiler_params=pltpu.CompilerParams(
            dimension_semantics=("parallel",),
            vmem_limit_bytes=32 * 1024 * 1024,
        ),
        cost_estimate=pl.CostEstimate(
            flops=flops,
            transcendentals=Bp * DOUT_PAD,
            bytes_accessed=bytes_accessed,
        ),
    )(x_flat, w1b, b1, w2b, b2, w3b, b3p, w4b, b4p)

    return out[:B, :dim_out].astype(jnp.float32)


if __name__ == "__main__":
    # Small shapes consistent with the forward: x is NCHW, dim_in = C*H*W.
    B, C, H, W = 2, 4, 16, 16
    dim_in = C * H * W          # 1024
    dim_out = 10

    key = jax.random.PRNGKey(0)
    key, kx = jax.random.split(key)
    x = jax.random.normal(kx, (B, C, H, W), jnp.float32)

    params = init_params(jax.random.PRNGKey(0), dim_in, dim_out)

    out = mlp_forward(x, params, dim_out)
    out = jax.block_until_ready(out)

    # Pure-JAX f32 reference of the same forward pass.
    def ref_fwd(x_nchw, p):
        w1, b1, w2, b2, w3, b3, w4, b4 = p
        h = x_nchw.reshape(x_nchw.shape[0], -1)
        h = jnp.maximum(h @ w1 + b1, 0.0)
        h = jnp.maximum(h @ w2 + b2, 0.0)
        h = jnp.maximum(h @ w3 + b3, 0.0)
        logits = h @ w4 + b4
        return jax.nn.softmax(logits, axis=1)

    ref = ref_fwd(x, params)

    assert out.shape == (B, dim_out)
    assert jnp.allclose(jnp.sum(out, axis=1), 1.0, atol=1e-2)   # softmax rows sum to ~1 (bf16 output)
    assert jnp.allclose(out, ref, atol=3e-2)                    # matches f32 reference (bf16 matmuls/output)
    print("KERNEL_OK")
</pallas_src>

<mosaic_0001>
module attributes {stable_mosaic.version = 11 : i64} {
  func.func @mlp_kernel(%arg0: i32, %arg1: memref<16x1024xf32, #tpu.memory_space<vmem>>, %arg2: memref<1024x512xbf16, #tpu.memory_space<vmem>>, %arg3: memref<1x512xf32, #tpu.memory_space<vmem>>, %arg4: memref<512x256xbf16, #tpu.memory_space<vmem>>, %arg5: memref<1x256xf32, #tpu.memory_space<vmem>>, %arg6: memref<256x128xbf16, #tpu.memory_space<vmem>>, %arg7: memref<1x128xf32, #tpu.memory_space<vmem>>, %arg8: memref<128x128xbf16, #tpu.memory_space<vmem>>, %arg9: memref<1x128xf32, #tpu.memory_space<vmem>>, %arg10: memref<16x128xbf16, #tpu.memory_space<vmem>>) attributes {dimension_semantics = [#tpu.dimension_semantics<parallel>], iteration_bounds = array<i64: 1>, scalar_prefetch = 0 : i64, scratch_operands = 0 : i64, tpu.core_type = #tpu.core_type<tc>, window_params = [{transform_indices = @transform_0, window_bounds = array<i64: 16, 1024>}, {pipeline_mode = #tpu.pipeline_mode<synchronous>, transform_indices = @transform_1, window_bounds = array<i64: 1024, 512>}, {pipeline_mode = #tpu.pipeline_mode<synchronous>, transform_indices = @transform_2, window_bounds = array<i64: 1, 512>}, {pipeline_mode = #tpu.pipeline_mode<synchronous>, transform_indices = @transform_3, window_bounds = array<i64: 512, 256>}, {pipeline_mode = #tpu.pipeline_mode<synchronous>, transform_indices = @transform_4, window_bounds = array<i64: 1, 256>}, {pipeline_mode = #tpu.pipeline_mode<synchronous>, transform_indices = @transform_5, window_bounds = array<i64: 256, 128>}, {pipeline_mode = #tpu.pipeline_mode<synchronous>, transform_indices = @transform_6, window_bounds = array<i64: 1, 128>}, {pipeline_mode = #tpu.pipeline_mode<synchronous>, transform_indices = @transform_7, window_bounds = array<i64: 128, 128>}, {pipeline_mode = #tpu.pipeline_mode<synchronous>, transform_indices = @transform_8, window_bounds = array<i64: 1, 128>}, {transform_indices = @transform_9, window_bounds = array<i64: 16, 128>}]} {
    %c0 = arith.constant 0 : index
    %c0_0 = arith.constant 0 : index
    %0 = vector.load %arg1[%c0, %c0_0] : memref<16x1024xf32, #tpu.memory_space<vmem>>, vector<16x1024xf32>
    %1 = arith.truncf %0 : vector<16x1024xf32> to vector<16x1024xbf16>
    %c0_1 = arith.constant 0 : index
    %c0_2 = arith.constant 0 : index
    %2 = vector.load %arg2[%c0_1, %c0_2] : memref<1024x512xbf16, #tpu.memory_space<vmem>>, vector<1024x512xbf16>
    %cst = arith.constant dense<0.000000e+00> : vector<16x512xf32>
    %3 = tpu.matmul %1, %2, %cst {dimension_numbers = #tpu.dot_dimension_numbers<[1], [0], [0], [1], [0, 0, 1, 1], [], []>} : vector<16x1024xbf16>, vector<1024x512xbf16>, vector<16x512xf32> -> vector<16x512xf32>
    %c0_3 = arith.constant 0 : index
    %c0_4 = arith.constant 0 : index
    %4 = vector.load %arg3[%c0_3, %c0_4] : memref<1x512xf32, #tpu.memory_space<vmem>>, vector<1x512xf32>
    %5 = vector.broadcast %4 : vector<1x512xf32> to vector<16x512xf32>
    %6 = arith.addf %3, %5 : vector<16x512xf32>
    %cst_5 = arith.constant 0.000000e+00 : f32
    %7 = vector.broadcast %cst_5 : f32 to vector<16x512xf32>
    %8 = arith.maximumf %6, %7 : vector<16x512xf32>
    %9 = arith.truncf %8 : vector<16x512xf32> to vector<16x512xbf16>
    %c0_6 = arith.constant 0 : index
    %c0_7 = arith.constant 0 : index
    %10 = vector.load %arg4[%c0_6, %c0_7] : memref<512x256xbf16, #tpu.memory_space<vmem>>, vector<512x256xbf16>
    %cst_8 = arith.constant dense<0.000000e+00> : vector<16x256xf32>
    %11 = tpu.matmul %9, %10, %cst_8 {dimension_numbers = #tpu.dot_dimension_numbers<[1], [0], [0], [1], [0, 0, 1, 1], [], []>} : vector<16x512xbf16>, vector<512x256xbf16>, vector<16x256xf32> -> vector<16x256xf32>
    %c0_9 = arith.constant 0 : index
    %c0_10 = arith.constant 0 : index
    %12 = vector.load %arg5[%c0_9, %c0_10] : memref<1x256xf32, #tpu.memory_space<vmem>>, vector<1x256xf32>
    %13 = vector.broadcast %12 : vector<1x256xf32> to vector<16x256xf32>
    %14 = arith.addf %11, %13 : vector<16x256xf32>
    %cst_11 = arith.constant 0.000000e+00 : f32
    %15 = vector.broadcast %cst_11 : f32 to vector<16x256xf32>
    %16 = arith.maximumf %14, %15 : vector<16x256xf32>
    %17 = arith.truncf %16 : vector<16x256xf32> to vector<16x256xbf16>
    %c0_12 = arith.constant 0 : index
    %c0_13 = arith.constant 0 : index
    %18 = vector.load %arg6[%c0_12, %c0_13] : memref<256x128xbf16, #tpu.memory_space<vmem>>, vector<256x128xbf16>
    %cst_14 = arith.constant dense<0.000000e+00> : vector<16x128xf32>
    %19 = tpu.matmul %17, %18, %cst_14 {dimension_numbers = #tpu.dot_dimension_numbers<[1], [0], [0], [1], [0, 0, 1, 1], [], []>} : vector<16x256xbf16>, vector<256x128xbf16>, vector<16x128xf32> -> vector<16x128xf32>
    %c0_15 = arith.constant 0 : index
    %c0_16 = arith.constant 0 : index
    %20 = vector.load %arg7[%c0_15, %c0_16] : memref<1x128xf32, #tpu.memory_space<vmem>>, vector<1x128xf32>
    %21 = vector.broadcast %20 : vector<1x128xf32> to vector<16x128xf32>
    %22 = arith.addf %19, %21 : vector<16x128xf32>
    %cst_17 = arith.constant 0.000000e+00 : f32
    %23 = vector.broadcast %cst_17 : f32 to vector<16x128xf32>
    %24 = arith.maximumf %22, %23 : vector<16x128xf32>
    %25 = arith.truncf %24 : vector<16x128xf32> to vector<16x128xbf16>
    %c0_18 = arith.constant 0 : index
    %c0_19 = arith.constant 0 : index
    %26 = vector.load %arg8[%c0_18, %c0_19] : memref<128x128xbf16, #tpu.memory_space<vmem>>, vector<128x128xbf16>
    %cst_20 = arith.constant dense<0.000000e+00> : vector<16x128xf32>
    %27 = tpu.matmul %25, %26, %cst_20 {dimension_numbers = #tpu.dot_dimension_numbers<[1], [0], [0], [1], [0, 0, 1, 1], [], []>} : vector<16x128xbf16>, vector<128x128xbf16>, vector<16x128xf32> -> vector<16x128xf32>
    %c0_21 = arith.constant 0 : index
    %c0_22 = arith.constant 0 : index
    %28 = vector.load %arg9[%c0_21, %c0_22] : memref<1x128xf32, #tpu.memory_space<vmem>>, vector<1x128xf32>
    %29 = vector.broadcast %28 : vector<1x128xf32> to vector<16x128xf32>
    %30 = arith.addf %27, %29 : vector<16x128xf32>
    %cst_23 = arith.constant dense<0xFF800000> : vector<16xf32>
    %31 = vector.multi_reduction <maximumf>, %30, %cst_23 [1] : vector<16x128xf32> to vector<16xf32>
    %32 = vector.shape_cast %31 : vector<16xf32> to vector<16x1xf32>
    %33 = vector.broadcast %32 : vector<16x1xf32> to vector<16x128xf32>
    %34 = arith.subf %30, %33 : vector<16x128xf32>
    %35 = math.exp %34 : vector<16x128xf32>
    %cst_24 = arith.constant dense<0.000000e+00> : vector<16xf32>
    %36 = vector.multi_reduction <add>, %35, %cst_24 [1] : vector<16x128xf32> to vector<16xf32>
    %37 = vector.shape_cast %36 : vector<16xf32> to vector<16x1xf32>
    %38 = tpu.reciprocal %37 : vector<16x1xf32> -> vector<16x1xf32>
    %39 = vector.broadcast %38 : vector<16x1xf32> to vector<16x128xf32>
    %40 = arith.mulf %35, %39 : vector<16x128xf32>
    %41 = arith.truncf %40 : vector<16x128xf32> to vector<16x128xbf16>
    %c0_25 = arith.constant 0 : index
    %c0_26 = arith.constant 0 : index
    %42 = vector.load %arg10[%c0_25, %c0_26] : memref<16x128xbf16, #tpu.memory_space<vmem>>, vector<16x128xbf16>
    tpu.vector_store %arg10[%c0_25, %c0_26], %41 {strides = array<i32>} : memref<16x128xbf16, #tpu.memory_space<vmem>>, vector<16x128xbf16>,
    return
  }
  func.func @transform_0(%arg0: i32) -> (i32, i32) {
    %c0_i32 = arith.constant 0 : i32
    %c0_i32_0 = arith.constant 0 : i32
    return %arg0, %c0_i32 : i32, i32
  }
  func.func @transform_1(%arg0: i32) -> (i32, i32) {
    %c0_i32 = arith.constant 0 : i32
    %c0_i32_0 = arith.constant 0 : i32
    %c0_i32_1 = arith.constant 0 : i32
    return %c0_i32, %c0_i32_0 : i32, i32
  }
  func.func @transform_2(%arg0: i32) -> (i32, i32) {
    %c0_i32 = arith.constant 0 : i32
    %c0_i32_0 = arith.constant 0 : i32
    %c0_i32_1 = arith.constant 0 : i32
    return %c0_i32, %c0_i32_0 : i32, i32
  }
  func.func @transform_3(%arg0: i32) -> (i32, i32) {
    %c0_i32 = arith.constant 0 : i32
    %c0_i32_0 = arith.constant 0 : i32
    %c0_i32_1 = arith.constant 0 : i32
    return %c0_i32, %c0_i32_0 : i32, i32
  }
  func.func @transform_4(%arg0: i32) -> (i32, i32) {
    %c0_i32 = arith.constant 0 : i32
    %c0_i32_0 = arith.constant 0 : i32
    %c0_i32_1 = arith.constant 0 : i32
    return %c0_i32, %c0_i32_0 : i32, i32
  }
  func.func @transform_5(%arg0: i32) -> (i32, i32) {
    %c0_i32 = arith.constant 0 : i32
    %c0_i32_0 = arith.constant 0 : i32
    %c0_i32_1 = arith.constant 0 : i32
    return %c0_i32, %c0_i32_0 : i32, i32
  }
  func.func @transform_6(%arg0: i32) -> (i32, i32) {
    %c0_i32 = arith.constant 0 : i32
    %c0_i32_0 = arith.constant 0 : i32
    %c0_i32_1 = arith.constant 0 : i32
    return %c0_i32, %c0_i32_0 : i32, i32
  }
  func.func @transform_7(%arg0: i32) -> (i32, i32) {
    %c0_i32 = arith.constant 0 : i32
    %c0_i32_0 = arith.constant 0 : i32
    %c0_i32_1 = arith.constant 0 : i32
    return %c0_i32, %c0_i32_0 : i32, i32
  }
  func.func @transform_8(%arg0: i32) -> (i32, i32) {
    %c0_i32 = arith.constant 0 : i32
    %c0_i32_0 = arith.constant 0 : i32
    %c0_i32_1 = arith.constant 0 : i32
    return %c0_i32, %c0_i32_0 : i32, i32
  }
  func.func @transform_9(%arg0: i32) -> (i32, i32) {
    %c0_i32 = arith.constant 0 : i32
    %c0_i32_0 = arith.constant 0 : i32
    return %arg0, %c0_i32 : i32, i32
  }
}

</mosaic_0001>

<llo_original>
// kernel: mlp_forward.1
$region0: #{mlp_forward.1}
  #allocation0 [shape = 'u32[]', space=smem, size = 0x4, offset = 0x4, fixed_abs, tag = 'smem constant byte address 0x4 - core index']
  #allocation1 [shape = 'u32[72,128]{1,0:T(1,128)}', space=vmem, size = 0x9000, scoped, tag = 'internal scratch']
  %s0 = inlined_call_operand.vmem [shape: f32[16,1024], index: 0, kind: input, shape index: {}]
  %s1 = inlined_call_operand.vmem [shape: bf16[1024,512], index: 1, kind: input, shape index: {}]
  %s2 = inlined_call_operand.vmem [shape: f32[1,512], index: 2, kind: input, shape index: {}]
  %s3 = inlined_call_operand.vmem [shape: bf16[512,256], index: 3, kind: input, shape index: {}]
  %s4 = inlined_call_operand.vmem [shape: f32[1,256], index: 4, kind: input, shape index: {}]
  %s5 = inlined_call_operand.vmem [shape: bf16[256,128], index: 5, kind: input, shape index: {}]
  %s6 = inlined_call_operand.vmem [shape: f32[1,128], index: 6, kind: input, shape index: {}]
  %s7 = inlined_call_operand.vmem [shape: bf16[128,128], index: 7, kind: input, shape index: {}]
  %s8 = inlined_call_operand.vmem [shape: f32[1,128], index: 8, kind: input, shape index: {}]
  %s9 = inlined_call_operand.vmem [shape: bf16[16,128], index: 9, kind: output, shape index: {}]
  %s10 = sld [smem:[#allocation0]]
  $region46: #{mlp_forward.1} parent=0
    _
  %s12 = ssub.s32 1, %s10
  %s13 = scalar_select 0, %s12, %s10
  // Predicated region
  $region2: #{mlp_forward.1} parent=0 // pred_check
    _
  $region3: #{mlp_forward.1} parent=0 // pred_check_branch
    %15 = sbr.rel (0) target = $region5
  $region4: #{mlp_forward.1} parent=0 // pred_region
    _
  $region5: #{mlp_forward.1} parent=0 // pred_fallthru
    _
  // Predicated region
  $region6: #{mlp_forward.1} parent=0 // pred_check
    _
  $region7: #{mlp_forward.1} parent=0 // pred_check_branch
    %17 = sbr.rel (0) target = $region9
  $region8: #{mlp_forward.1} parent=0 // pred_region
    _
  $region9: #{mlp_forward.1} parent=0 // pred_fallthru
    _
  // Predicated region
  $region10: #{mlp_forward.1} parent=0 // pred_check
    _
  $region11: #{mlp_forward.1} parent=0 // pred_check_branch
    %19 = sbr.rel (0) target = $region13
  $region12: #{mlp_forward.1} parent=0 // pred_region
    _
  $region13: #{mlp_forward.1} parent=0 // pred_fallthru
    _
  // Predicated region
  $region14: #{mlp_forward.1} parent=0 // pred_check
    _
  $region15: #{mlp_forward.1} parent=0 // pred_check_branch
    %21 = sbr.rel (0) target = $region17
  $region16: #{mlp_forward.1} parent=0 // pred_region
    _
  $region17: #{mlp_forward.1} parent=0 // pred_fallthru
    _
  // Predicated region
  $region18: #{mlp_forward.1} parent=0 // pred_check
    _
  $region19: #{mlp_forward.1} parent=0 // pred_check_branch
    %23 = sbr.rel (0) target = $region21
  $region20: #{mlp_forward.1} parent=0 // pred_region
    _
  $region21: #{mlp_forward.1} parent=0 // pred_fallthru
    _
  // Predicated region
  $region22: #{mlp_forward.1} parent=0 // pred_check
    _
  $region23: #{mlp_forward.1} parent=0 // pred_check_branch
    %25 = sbr.rel (0) target = $region25
  $region24: #{mlp_forward.1} parent=0 // pred_region
    _
  $region25: #{mlp_forward.1} parent=0 // pred_fallthru
    _
  // Predicated region
  $region26: #{mlp_forward.1} parent=0 // pred_check
    _
  $region27: #{mlp_forward.1} parent=0 // pred_check_branch
    %27 = sbr.rel (0) target = $region29
  $region28: #{mlp_forward.1} parent=0 // pred_region
    _
  $region29: #{mlp_forward.1} parent=0 // pred_fallthru
    _
  // Predicated region
  $region30: #{mlp_forward.1} parent=0 // pred_check
    _
  $region31: #{mlp_forward.1} parent=0 // pred_check_branch
    %29 = sbr.rel (0) target = $region33
  $region32: #{mlp_forward.1} parent=0 // pred_region
    _
  $region33: #{mlp_forward.1} parent=0 // pred_fallthru
    _
  // Predicated region
  $region34: #{mlp_forward.1} parent=0 // pred_check
    _
  $region35: #{mlp_forward.1} parent=0 // pred_check_branch
    %31 = sbr.rel (0) target = $region37
  $region36: #{mlp_forward.1} parent=0 // pred_region
    _
  $region37: #{mlp_forward.1} parent=0 // pred_fallthru
    _
  %v32 = vld [vmem:[%s0] sm:$0xff]
  %v33 = vld [vmem:[%s0 + $0x8] sm:$0xff]
  %v34 = vld [vmem:[%s0 + $0x10] sm:$0xff]
  %v35 = vld [vmem:[%s0 + $0x18] sm:$0xff]
  %v36 = vld [vmem:[%s0 + $0x20] sm:$0xff]
  %v37 = vld [vmem:[%s0 + $0x28] sm:$0xff]
  %v38 = vld [vmem:[%s0 + $0x30] sm:$0xff]
  %v39 = vld [vmem:[%s0 + $0x38] sm:$0xff]
  %v40 = vld [vmem:[%s0 + $0x40] sm:$0xff]
  %v41 = vld [vmem:[%s0 + $0x48] sm:$0xff]
  %v42 = vld [vmem:[%s0 + $0x50] sm:$0xff]
  %v43 = vld [vmem:[%s0 + $0x58] sm:$0xff]
  %v44 = vld [vmem:[%s0 + $0x60] sm:$0xff]
  %v45 = vld [vmem:[%s0 + $0x68] sm:$0xff]
  %v46 = vld [vmem:[%s0 + $0x70] sm:$0xff]
  %v47 = vld [vmem:[%s0 + $0x78] sm:$0xff]
  %v48 = vpack.c.bf16 %v40, %v32
  %v49 = vpack.c.bf16 %v41, %v33
  %v50 = vpack.c.bf16 %v42, %v34
  %v51 = vpack.c.bf16 %v43, %v35
  %v52 = vpack.c.bf16 %v44, %v36
  %v53 = vpack.c.bf16 %v45, %v37
  %v54 = vpack.c.bf16 %v46, %v38
  %v55 = vpack.c.bf16 %v47, %v39
  %v56 = vld [vmem:[%s1] sm:$0xff]
  %v57 = vld [vmem:[%s1 + $0x8] sm:$0xff]
  %v58 = vld [vmem:[%s1 + $0x10] sm:$0xff]
  %v59 = vld [vmem:[%s1 + $0x18] sm:$0xff]
  %v60 = vld [vmem:[%s1 + $0x20] sm:$0xff]
  %v61 = vld [vmem:[%s1 + $0x28] sm:$0xff]
  %v62 = vld [vmem:[%s1 + $0x30] sm:$0xff]
  %v63 = vld [vmem:[%s1 + $0x38] sm:$0xff]
  %v64 = vld [vmem:[%s1 + $0x40] sm:$0xff]
  %v65 = vld [vmem:[%s1 + $0x48] sm:$0xff]
  %v66 = vld [vmem:[%s1 + $0x50] sm:$0xff]
  %v67 = vld [vmem:[%s1 + $0x58] sm:$0xff]
  %v68 = vld [vmem:[%s1 + $0x60] sm:$0xff]
  %v69 = vld [vmem:[%s1 + $0x68] sm:$0xff]
  %v70 = vld [vmem:[%s1 + $0x70] sm:$0xff]
  %v71 = vld [vmem:[%s1 + $0x78] sm:$0xff]
  %v72 = vld [vmem:[%s1 + $0x80] sm:$0xff]
  %v73 = vld [vmem:[%s1 + $0x88] sm:$0xff]
  %v74 = vld [vmem:[%s1 + $0x90] sm:$0xff]
  %v75 = vld [vmem:[%s1 + $0x98] sm:$0xff]
  %v76 = vld [vmem:[%s1 + $0xa0] sm:$0xff]
  %v77 = vld [vmem:[%s1 + $0xa8] sm:$0xff]
  %v78 = vld [vmem:[%s1 + $0xb0] sm:$0xff]
  %v79 = vld [vmem:[%s1 + $0xb8] sm:$0xff]
  %v80 = vld [vmem:[%s1 + $0xc0] sm:$0xff]
  %v81 = vld [vmem:[%s1 + $0xc8] sm:$0xff]
  %v82 = vld [vmem:[%s1 + $0xd0] sm:$0xff]
  %v83 = vld [vmem:[%s1 + $0xd8] sm:$0xff]
  %v84 = vld [vmem:[%s1 + $0xe0] sm:$0xff]
  %v85 = vld [vmem:[%s1 + $0xe8] sm:$0xff]
  %v86 = vld [vmem:[%s1 + $0xf0] sm:$0xff]
  %v87 = vld [vmem:[%s1 + $0xf8] sm:$0xff]
  %v88 = vld [vmem:[%s1 + $0x100] sm:$0xff]
  %v89 = vld [vmem:[%s1 + $0x108] sm:$0xff]
  %v90 = vld [vmem:[%s1 + $0x110] sm:$0xff]
  %v91 = vld [vmem:[%s1 + $0x118] sm:$0xff]
  %v92 = vld [vmem:[%s1 + $0x120] sm:$0xff]
  %v93 = vld [vmem:[%s1 + $0x128] sm:$0xff]
  %v94 = vld [vmem:[%s1 + $0x130] sm:$0xff]
  %v95 = vld [vmem:[%s1 + $0x138] sm:$0xff]
  %v96 = vld [vmem:[%s1 + $0x140] sm:$0xff]
  %v97 = vld [vmem:[%s1 + $0x148] sm:$0xff]
  %v98 = vld [vmem:[%s1 + $0x150] sm:$0xff]
  %v99 = vld [vmem:[%s1 + $0x158] sm:$0xff]
  %v100 = vld [vmem:[%s1 + $0x160] sm:$0xff]
  %v101 = vld [vmem:[%s1 + $0x168] sm:$0xff]
  %v102 = vld [vmem:[%s1 + $0x170] sm:$0xff]
  %v103 = vld [vmem:[%s1 + $0x178] sm:$0xff]
  %v104 = vld [vmem:[%s1 + $0x180] sm:$0xff]
  %v105 = vld [vmem:[%s1 + $0x188] sm:$0xff]
  %v106 = vld [vmem:[%s1 + $0x190] sm:$0xff]
  %v107 = vld [vmem:[%s1 + $0x198] sm:$0xff]
  %v108 = vld [vmem:[%s1 + $0x1a0] sm:$0xff]
  %v109 = vld [vmem:[%s1 + $0x1a8] sm:$0xff]
  %v110 = vld [vmem:[%s1 + $0x1b0] sm:$0xff]
  %v111 = vld [vmem:[%s1 + $0x1b8] sm:$0xff]
  %v112 = vld [vmem:[%s1 + $0x1c0] sm:$0xff]
  %v113 = vld [vmem:[%s1 + $0x1c8] sm:$0xff]
  %v114 = vld [vmem:[%s1 + $0x1d0] sm:$0xff]
  %v115 = vld [vmem:[%s1 + $0x1d8] sm:$0xff]
  %v116 = vld [vmem:[%s1 + $0x1e0] sm:$0xff]
  %v117 = vld [vmem:[%s1 + $0x1e8] sm:$0xff]
  %v118 = vld [vmem:[%s1 + $0x1f0] sm:$0xff]
  %v119 = vld [vmem:[%s1 + $0x1f8] sm:$0xff]
  %v120 = vld [vmem:[%s1 + $0x200] sm:$0xff]
  %v121 = vld [vmem:[%s1 + $0x208] sm:$0xff]
  %v122 = vld [vmem:[%s1 + $0x210] sm:$0xff]
  %v123 = vld [vmem:[%s1 + $0x218] sm:$0xff]
  %v124 = vld [vmem:[%s1 + $0x220] sm:$0xff]
  %v125 = vld [vmem:[%s1 + $0x228] sm:$0xff]
  %v126 = vld [vmem:[%s1 + $0x230] sm:$0xff]
  %v127 = vld [vmem:[%s1 + $0x238] sm:$0xff]
  %v128 = vld [vmem:[%s1 + $0x240] sm:$0xff]
  %v129 = vld [vmem:[%s1 + $0x248] sm:$0xff]
  %v130 = vld [vmem:[%s1 + $0x250] sm:$0xff]
  %v131 = vld [vmem:[%s1 + $0x258] sm:$0xff]
  %v132 = vld [vmem:[%s1 + $0x260] sm:$0xff]
  %v133 = vld [vmem:[%s1 + $0x268] sm:$0xff]
  %v134 = vld [vmem:[%s1 + $0x270] sm:$0xff]
  %v135 = vld [vmem:[%s1 + $0x278] sm:$0xff]
  %v136 = vld [vmem:[%s1 + $0x280] sm:$0xff]
  %v137 = vld [vmem:[%s1 + $0x288] sm:$0xff]
  %v138 = vld [vmem:[%s1 + $0x290] sm:$0xff]
  %v139 = vld [vmem:[%s1 + $0x298] sm:$0xff]
  %v140 = vld [vmem:[%s1 + $0x2a0] sm:$0xff]
  %v141 = vld [vmem:[%s1 + $0x2a8] sm:$0xff]
  %v142 = vld [vmem:[%s1 + $0x2b0] sm:$0xff]
  %v143 = vld [vmem:[%s1 + $0x2b8] sm:$0xff]
  %v144 = vld [vmem:[%s1 + $0x2c0] sm:$0xff]
  %v145 = vld [vmem:[%s1 + $0x2c8] sm:$0xff]
  %v146 = vld [vmem:[%s1 + $0x2d0] sm:$0xff]
  %v147 = vld [vmem:[%s1 + $0x2d8] sm:$0xff]
  %v148 = vld [vmem:[%s1 + $0x2e0] sm:$0xff]
  %v149 = vld [vmem:[%s1 + $0x2e8] sm:$0xff]
  %v150 = vld [vmem:[%s1 + $0x2f0] sm:$0xff]
  %v151 = vld [vmem:[%s1 + $0x2f8] sm:$0xff]
  %v152 = vld [vmem:[%s1 + $0x300] sm:$0xff]
  %v153 = vld [vmem:[%s1 + $0x308] sm:$0xff]
  %v154 = vld [vmem:[%s1 + $0x310] sm:$0xff]
  %v155 = vld [vmem:[%s1 + $0x318] sm:$0xff]
  %v156 = vld [vmem:[%s1 + $0x320] sm:$0xff]
  %v157 = vld [vmem:[%s1 + $0x328] sm:$0xff]
  %v158 = vld [vmem:[%s1 + $0x330] sm:$0xff]
  %v159 = vld [vmem:[%s1 + $0x338] sm:$0xff]
  %v160 = vld [vmem:[%s1 + $0x340] sm:$0xff]
  %v161 = vld [vmem:[%s1 + $0x348] sm:$0xff]
  %v162 = vld [vmem:[%s1 + $0x350] sm:$0xff]
  %v163 = vld [vmem:[%s1 + $0x358] sm:$0xff]
  %v164 = vld [vmem:[%s1 + $0x360] sm:$0xff]
  %v165 = vld [vmem:[%s1 + $0x368] sm:$0xff]
  %v166 = vld [vmem:[%s1 + $0x370] sm:$0xff]
  %v167 = vld [vmem:[%s1 + $0x378] sm:$0xff]
  %v168 = vld [vmem:[%s1 + $0x380] sm:$0xff]
  %v169 = vld [vmem:[%s1 + $0x388] sm:$0xff]
  %v170 = vld [vmem:[%s1 + $0x390] sm:$0xff]
  %v171 = vld [vmem:[%s1 + $0x398] sm:$0xff]
  %v172 = vld [vmem:[%s1 + $0x3a0] sm:$0xff]
  %v173 = vld [vmem:[%s1 + $0x3a8] sm:$0xff]
  %v174 = vld [vmem:[%s1 + $0x3b0] sm:$0xff]
  %v175 = vld [vmem:[%s1 + $0x3b8] sm:$0xff]
  %v176 = vld [vmem:[%s1 + $0x3c0] sm:$0xff]
  %v177 = vld [vmem:[%s1 + $0x3c8] sm:$0xff]
  %v178 = vld [vmem:[%s1 + $0x3d0] sm:$0xff]
  %v179 = vld [vmem:[%s1 + $0x3d8] sm:$0xff]
  %v180 = vld [vmem:[%s1 + $0x3e0] sm:$0xff]
  %v181 = vld [vmem:[%s1 + $0x3e8] sm:$0xff]
  %v182 = vld [vmem:[%s1 + $0x3f0] sm:$0xff]
  %v183 = vld [vmem:[%s1 + $0x3f8] sm:$0xff]
  %v184 = vld [vmem:[%s1 + $0x400] sm:$0xff]
  %v185 = vld [vmem:[%s1 + $0x408] sm:$0xff]
  %v186 = vld [vmem:[%s1 + $0x410] sm:$0xff]
  %v187 = vld [vmem:[%s1 + $0x418] sm:$0xff]
  %v188 = vld [vmem:[%s1 + $0x420] sm:$0xff]
  %v189 = vld [vmem:[%s1 + $0x428] sm:$0xff]
  %v190 = vld [vmem:[%s1 + $0x430] sm:$0xff]
  %v191 = vld [vmem:[%s1 + $0x438] sm:$0xff]
  %v192 = vld [vmem:[%s1 + $0x440] sm:$0xff]
  %v193 = vld [vmem:[%s1 + $0x448] sm:$0xff]
  %v194 = vld [vmem:[%s1 + $0x450] sm:$0xff]
  %v195 = vld [vmem:[%s1 + $0x458] sm:$0xff]
  %v196 = vld [vmem:[%s1 + $0x460] sm:$0xff]
  %v197 = vld [vmem:[%s1 + $0x468] sm:$0xff]
  %v198 = vld [vmem:[%s1 + $0x470] sm:$0xff]
  %v199 = vld [vmem:[%s1 + $0x478] sm:$0xff]
  %v200 = vld [vmem:[%s1 + $0x480] sm:$0xff]
  %v201 = vld [vmem:[%s1 + $0x488] sm:$0xff]
  %v202 = vld [vmem:[%s1 + $0x490] sm:$0xff]
  %v203 = vld [vmem:[%s1 + $0x498] sm:$0xff]
  %v204 = vld [vmem:[%s1 + $0x4a0] sm:$0xff]
  %v205 = vld [vmem:[%s1 + $0x4a8] sm:$0xff]
  %v206 = vld [vmem:[%s1 + $0x4b0] sm:$0xff]
  %v207 = vld [vmem:[%s1 + $0x4b8] sm:$0xff]
  %v208 = vld [vmem:[%s1 + $0x4c0] sm:$0xff]
  %v209 = vld [vmem:[%s1 + $0x4c8] sm:$0xff]
  %v210 = vld [vmem:[%s1 + $0x4d0] sm:$0xff]
  %v211 = vld [vmem:[%s1 + $0x4d8] sm:$0xff]
  %v212 = vld [vmem:[%s1 + $0x4e0] sm:$0xff]
  %v213 = vld [vmem:[%s1 + $0x4e8] sm:$0xff]
  %v214 = vld [vmem:[%s1 + $0x4f0] sm:$0xff]
  %v215 = vld [vmem:[%s1 + $0x4f8] sm:$0xff]
  %v216 = vld [vmem:[%s1 + $0x500] sm:$0xff]
  %v217 = vld [vmem:[%s1 + $0x508] sm:$0xff]
  %v218 = vld [vmem:[%s1 + $0x510] sm:$0xff]
  %v219 = vld [vmem:[%s1 + $0x518] sm:$0xff]
  %v220 = vld [vmem:[%s1 + $0x520] sm:$0xff]
  %v221 = vld [vmem:[%s1 + $0x528] sm:$0xff]
  %v222 = vld [vmem:[%s1 + $0x530] sm:$0xff]
  %v223 = vld [vmem:[%s1 + $0x538] sm:$0xff]
  %v224 = vld [vmem:[%s1 + $0x540] sm:$0xff]
  %v225 = vld [vmem:[%s1 + $0x548] sm:$0xff]
  %v226 = vld [vmem:[%s1 + $0x550] sm:$0xff]
  %v227 = vld [vmem:[%s1 + $0x558] sm:$0xff]
  %v228 = vld [vmem:[%s1 + $0x560] sm:$0xff]
  %v229 = vld [vmem:[%s1 + $0x568] sm:$0xff]
  %v230 = vld [vmem:[%s1 + $0x570] sm:$0xff]
  %v231 = vld [vmem:[%s1 + $0x578] sm:$0xff]
  %v232 = vld [vmem:[%s1 + $0x580] sm:$0xff]
  %v233 = vld [vmem:[%s1 + $0x588] sm:$0xff]
  %v234 = vld [vmem:[%s1 + $0x590] sm:$0xff]
  %v235 = vld [vmem:[%s1 + $0x598] sm:$0xff]
  %v236 = vld [vmem:[%s1 + $0x5a0] sm:$0xff]
  %v237 = vld [vmem:[%s1 + $0x5a8] sm:$0xff]
  %v238 = vld [vmem:[%s1 + $0x5b0] sm:$0xff]
  %v239 = vld [vmem:[%s1 + $0x5b8] sm:$0xff]
  %v240 = vld [vmem:[%s1 + $0x5c0] sm:$0xff]
  %v241 = vld [vmem:[%s1 + $0x5c8] sm:$0xff]
  %v242 = vld [vmem:[%s1 + $0x5d0] sm:$0xff]
  %v243 = vld [vmem:[%s1 + $0x5d8] sm:$0xff]
  %v244 = vld [vmem:[%s1 + $0x5e0] sm:$0xff]
  %v245 = vld [vmem:[%s1 + $0x5e8] sm:$0xff]
  %v246 = vld [vmem:[%s1 + $0x5f0] sm:$0xff]
  %v247 = vld [vmem:[%s1 + $0x5f8] sm:$0xff]
  %v248 = vld [vmem:[%s1 + $0x600] sm:$0xff]
  %v249 = vld [vmem:[%s1 + $0x608] sm:$0xff]
  %v250 = vld [vmem:[%s1 + $0x610] sm:$0xff]
  %v251 = vld [vmem:[%s1 + $0x618] sm:$0xff]
  %v252 = vld [vmem:[%s1 + $0x620] sm:$0xff]
  %v253 = vld [vmem:[%s1 + $0x628] sm:$0xff]
  %v254 = vld [vmem:[%s1 + $0x630] sm:$0xff]
  %v255 = vld [vmem:[%s1 + $0x638] sm:$0xff]
  %v256 = vld [vmem:[%s1 + $0x640] sm:$0xff]
  %v257 = vld [vmem:[%s1 + $0x648] sm:$0xff]
  %v258 = vld [vmem:[%s1 + $0x650] sm:$0xff]
  %v259 = vld [vmem:[%s1 + $0x658] sm:$0xff]
  %v260 = vld [vmem:[%s1 + $0x660] sm:$0xff]
  %v261 = vld [vmem:[%s1 + $0x668] sm:$0xff]
  %v262 = vld [vmem:[%s1 + $0x670] sm:$0xff]
  %v263 = vld [vmem:[%s1 + $0x678] sm:$0xff]
  %v264 = vld [vmem:[%s1 + $0x680] sm:$0xff]
  %v265 = vld [vmem:[%s1 + $0x688] sm:$0xff]
  %v266 = vld [vmem:[%s1 + $0x690] sm:$0xff]
  %v267 = vld [vmem:[%s1 + $0x698] sm:$0xff]
  %v268 = vld [vmem:[%s1 + $0x6a0] sm:$0xff]
  %v269 = vld [vmem:[%s1 + $0x6a8] sm:$0xff]
  %v270 = vld [vmem:[%s1 + $0x6b0] sm:$0xff]
  %v271 = vld [vmem:[%s1 + $0x6b8] sm:$0xff]
  %v272 = vld [vmem:[%s1 + $0x6c0] sm:$0xff]
  %v273 = vld [vmem:[%s1 + $0x6c8] sm:$0xff]
  %v274 = vld [vmem:[%s1 + $0x6d0] sm:$0xff]
  %v275 = vld [vmem:[%s1 + $0x6d8] sm:$0xff]
  %v276 = vld [vmem:[%s1 + $0x6e0] sm:$0xff]
  %v277 = vld [vmem:[%s1 + $0x6e8] sm:$0xff]
  %v278 = vld [vmem:[%s1 + $0x6f0] sm:$0xff]
  %v279 = vld [vmem:[%s1 + $0x6f8] sm:$0xff]
  %v280 = vld [vmem:[%s1 + $0x700] sm:$0xff]
  %v281 = vld [vmem:[%s1 + $0x708] sm:$0xff]
  %v282 = vld [vmem:[%s1 + $0x710] sm:$0xff]
  %v283 = vld [vmem:[%s1 + $0x718] sm:$0xff]
  %v284 = vld [vmem:[%s1 + $0x720] sm:$0xff]
  %v285 = vld [vmem:[%s1 + $0x728] sm:$0xff]
  %v286 = vld [vmem:[%s1 + $0x730] sm:$0xff]
  %v287 = vld [vmem:[%s1 + $0x738] sm:$0xff]
  %v288 = vld [vmem:[%s1 + $0x740] sm:$0xff]
  %v289 = vld [vmem:[%s1 + $0x748] sm:$0xff]
  %v290 = vld [vmem:[%s1 + $0x750] sm:$0xff]
  %v291 = vld [vmem:[%s1 + $0x758] sm:$0xff]
  %v292 = vld [vmem:[%s1 + $0x760] sm:$0xff]
  %v293 = vld [vmem:[%s1 + $0x768] sm:$0xff]
  %v294 = vld [vmem:[%s1 + $0x770] sm:$0xff]
  %v295 = vld [vmem:[%s1 + $0x778] sm:$0xff]
  %v296 = vld [vmem:[%s1 + $0x780] sm:$0xff]
  %v297 = vld [vmem:[%s1 + $0x788] sm:$0xff]
  %v298 = vld [vmem:[%s1 + $0x790] sm:$0xff]
  %v299 = vld [vmem:[%s1 + $0x798] sm:$0xff]
  %v300 = vld [vmem:[%s1 + $0x7a0] sm:$0xff]
  %v301 = vld [vmem:[%s1 + $0x7a8] sm:$0xff]
  %v302 = vld [vmem:[%s1 + $0x7b0] sm:$0xff]
  %v303 = vld [vmem:[%s1 + $0x7b8] sm:$0xff]
  %v304 = vld [vmem:[%s1 + $0x7c0] sm:$0xff]
  %v305 = vld [vmem:[%s1 + $0x7c8] sm:$0xff]
  %v306 = vld [vmem:[%s1 + $0x7d0] sm:$0xff]
  %v307 = vld [vmem:[%s1 + $0x7d8] sm:$0xff]
  %v308 = vld [vmem:[%s1 + $0x7e0] sm:$0xff]
  %v309 = vld [vmem:[%s1 + $0x7e8] sm:$0xff]
  %v310 = vld [vmem:[%s1 + $0x7f0] sm:$0xff]
  %v311 = vld [vmem:[%s1 + $0x7f8] sm:$0xff]
  %v312 = vld [vmem:[%s2] sm:$0xf]
  %v314 = vperm.slane %v312, 0
  %v315 = vperm.slane %v312, 1
  %v316 = vperm.slane %v312, 2
  %v317 = vperm.slane %v312, 3
  %v578 = vunpack.c.l.b16 %v56
  %v579 = vunpack.c.h.b16 %v56
  %v580 = vunpack.c.l.b16 %v57
  %v581 = vunpack.c.h.b16 %v57
  %v582 = vunpack.c.l.b16 %v58
  %v583 = vunpack.c.h.b16 %v58
  %v584 = vunpack.c.l.b16 %v59
  %v585 = vunpack.c.h.b16 %v59
  %v586 = vunpack.c.l.b16 %v60
  %v587 = vunpack.c.h.b16 %v60
  %v588 = vunpack.c.l.b16 %v61
  %v589 = vunpack.c.h.b16 %v61
  %v590 = vunpack.c.l.b16 %v62
  %v591 = vunpack.c.h.b16 %v62
  %v592 = vunpack.c.l.b16 %v63
  %v593 = vunpack.c.h.b16 %v63
  %v594 = vunpack.c.l.b16 %v64
  %v595 = vunpack.c.h.b16 %v64
  %v596 = vunpack.c.l.b16 %v65
  %v597 = vunpack.c.h.b16 %v65
  %v598 = vunpack.c.l.b16 %v66
  %v599 = vunpack.c.h.b16 %v66
  %v600 = vunpack.c.l.b16 %v67
  %v601 = vunpack.c.h.b16 %v67
  %v602 = vunpack.c.l.b16 %v68
  %v603 = vunpack.c.h.b16 %v68
  %v604 = vunpack.c.l.b16 %v69
  %v605 = vunpack.c.h.b16 %v69
  %v606 = vunpack.c.l.b16 %v70
  %v607 = vunpack.c.h.b16 %v70
  %v608 = vunpack.c.l.b16 %v71
  %v609 = vunpack.c.h.b16 %v71
  %v610 = vunpack.c.l.b16 %v72
  %v611 = vunpack.c.h.b16 %v72
  %v612 = vunpack.c.l.b16 %v73
  %v613 = vunpack.c.h.b16 %v73
  %v614 = vunpack.c.l.b16 %v74
  %v615 = vunpack.c.h.b16 %v74
  %v616 = vunpack.c.l.b16 %v75
  %v617 = vunpack.c.h.b16 %v75
  %v618 = vunpack.c.l.b16 %v76
  %v619 = vunpack.c.h.b16 %v76
  %v620 = vunpack.c.l.b16 %v77
  %v621 = vunpack.c.h.b16 %v77
  %v622 = vunpack.c.l.b16 %v78
  %v623 = vunpack.c.h.b16 %v78
  %v624 = vunpack.c.l.b16 %v79
  %v625 = vunpack.c.h.b16 %v79
  %v626 = vunpack.c.l.b16 %v80
  %v627 = vunpack.c.h.b16 %v80
  %v628 = vunpack.c.l.b16 %v81
  %v629 = vunpack.c.h.b16 %v81
  %v630 = vunpack.c.l.b16 %v82
  %v631 = vunpack.c.h.b16 %v82
  %v632 = vunpack.c.l.b16 %v83
  %v633 = vunpack.c.h.b16 %v83
  %v634 = vunpack.c.l.b16 %v84
  %v635 = vunpack.c.h.b16 %v84
  %v636 = vunpack.c.l.b16 %v85
  %v637 = vunpack.c.h.b16 %v85
  %v638 = vunpack.c.l.b16 %v86
  %v639 = vunpack.c.h.b16 %v86
  %v640 = vunpack.c.l.b16 %v87
  %v641 = vunpack.c.h.b16 %v87
  %v642 = vunpack.c.l.b16 %v88
  %v643 = vunpack.c.h.b16 %v88
  %v644 = vunpack.c.l.b16 %v89
  %v645 = vunpack.c.h.b16 %v89
  %v646 = vunpack.c.l.b16 %v90
  %v647 = vunpack.c.h.b16 %v90
  %v648 = vunpack.c.l.b16 %v91
  %v649 = vunpack.c.h.b16 %v91
  %v650 = vunpack.c.l.b16 %v92
  %v651 = vunpack.c.h.b16 %v92
  %v652 = vunpack.c.l.b16 %v93
  %v653 = vunpack.c.h.b16 %v93
  %v654 = vunpack.c.l.b16 %v94
  %v655 = vunpack.c.h.b16 %v94
  %v656 = vunpack.c.l.b16 %v95
  %v657 = vunpack.c.h.b16 %v95
  %v658 = vunpack.c.l.b16 %v96
  %v659 = vunpack.c.h.b16 %v96
  %v660 = vunpack.c.l.b16 %v97
  %v661 = vunpack.c.h.b16 %v97
  %v662 = vunpack.c.l.b16 %v98
  %v663 = vunpack.c.h.b16 %v98
  %v664 = vunpack.c.l.b16 %v99
  %v665 = vunpack.c.h.b16 %v99
  %v666 = vunpack.c.l.b16 %v100
  %v667 = vunpack.c.h.b16 %v100
  %v668 = vunpack.c.l.b16 %v101
  %v669 = vunpack.c.h.b16 %v101
  %v670 = vunpack.c.l.b16 %v102
  %v671 = vunpack.c.h.b16 %v102
  %v672 = vunpack.c.l.b16 %v103
  %v673 = vunpack.c.h.b16 %v103
  %v674 = vunpack.c.l.b16 %v104
  %v675 = vunpack.c.h.b16 %v104
  %v676 = vunpack.c.l.b16 %v105
  %v677 = vunpack.c.h.b16 %v105
  %v678 = vunpack.c.l.b16 %v106
  %v679 = vunpack.c.h.b16 %v106
  %v680 = vunpack.c.l.b16 %v107
  %v681 = vunpack.c.h.b16 %v107
  %v682 = vunpack.c.l.b16 %v108
  %v683 = vunpack.c.h.b16 %v108
  %v684 = vunpack.c.l.b16 %v109
  %v685 = vunpack.c.h.b16 %v109
  %v686 = vunpack.c.l.b16 %v110
  %v687 = vunpack.c.h.b16 %v110
  %v688 = vunpack.c.l.b16 %v111
  %v689 = vunpack.c.h.b16 %v111
  %v690 = vunpack.c.l.b16 %v112
  %v691 = vunpack.c.h.b16 %v112
  %v692 = vunpack.c.l.b16 %v113
  %v693 = vunpack.c.h.b16 %v113
  %v694 = vunpack.c.l.b16 %v114
  %v695 = vunpack.c.h.b16 %v114
  %v696 = vunpack.c.l.b16 %v115
  %v697 = vunpack.c.h.b16 %v115
  %v698 = vunpack.c.l.b16 %v116
  %v699 = vunpack.c.h.b16 %v116
  %v700 = vunpack.c.l.b16 %v117
  %v701 = vunpack.c.h.b16 %v117
  %v702 = vunpack.c.l.b16 %v118
  %v703 = vunpack.c.h.b16 %v118
  %v704 = vunpack.c.l.b16 %v119
  %v705 = vunpack.c.h.b16 %v119
  %v706 = vunpack.c.l.b16 %v120
  %v707 = vunpack.c.h.b16 %v120
  %v708 = vunpack.c.l.b16 %v121
  %v709 = vunpack.c.h.b16 %v121
  %v710 = vunpack.c.l.b16 %v122
  %v711 = vunpack.c.h.b16 %v122
  %v712 = vunpack.c.l.b16 %v123
  %v713 = vunpack.c.h.b16 %v123
  %v714 = vunpack.c.l.b16 %v124
  %v715 = vunpack.c.h.b16 %v124
  %v716 = vunpack.c.l.b16 %v125
  %v717 = vunpack.c.h.b16 %v125
  %v718 = vunpack.c.l.b16 %v126
  %v719 = vunpack.c.h.b16 %v126
  %v720 = vunpack.c.l.b16 %v127
  %v721 = vunpack.c.h.b16 %v127
  %v722 = vunpack.c.l.b16 %v128
  %v723 = vunpack.c.h.b16 %v128
  %v724 = vunpack.c.l.b16 %v129
  %v725 = vunpack.c.h.b16 %v129
  %v726 = vunpack.c.l.b16 %v130
  %v727 = vunpack.c.h.b16 %v130
  %v728 = vunpack.c.l.b16 %v131
  %v729 = vunpack.c.h.b16 %v131
  %v730 = vunpack.c.l.b16 %v132
  %v731 = vunpack.c.h.b16 %v132
  %v732 = vunpack.c.l.b16 %v133
  %v733 = vunpack.c.h.b16 %v133
  %v734 = vunpack.c.l.b16 %v134
  %v735 = vunpack.c.h.b16 %v134
  %v736 = vunpack.c.l.b16 %v135
  %v737 = vunpack.c.h.b16 %v135
  %v738 = vunpack.c.l.b16 %v136
  %v739 = vunpack.c.h.b16 %v136
  %v740 = vunpack.c.l.b16 %v137
  %v741 = vunpack.c.h.b16 %v137
  %v742 = vunpack.c.l.b16 %v138
  %v743 = vunpack.c.h.b16 %v138
  %v744 = vunpack.c.l.b16 %v139
  %v745 = vunpack.c.h.b16 %v139
  %v746 = vunpack.c.l.b16 %v140
  %v747 = vunpack.c.h.b16 %v140
  %v748 = vunpack.c.l.b16 %v141
  %v749 = vunpack.c.h.b16 %v141
  %v750 = vunpack.c.l.b16 %v142
  %v751 = vunpack.c.h.b16 %v142
  %v752 = vunpack.c.l.b16 %v143
  %v753 = vunpack.c.h.b16 %v143
  %v754 = vunpack.c.l.b16 %v144
  %v755 = vunpack.c.h.b16 %v144
  %v756 = vunpack.c.l.b16 %v145
  %v757 = vunpack.c.h.b16 %v145
  %v758 = vunpack.c.l.b16 %v146
  %v759 = vunpack.c.h.b16 %v146
  %v760 = vunpack.c.l.b16 %v147
  %v761 = vunpack.c.h.b16 %v147
  %v762 = vunpack.c.l.b16 %v148
  %v763 = vunpack.c.h.b16 %v148
  %v764 = vunpack.c.l.b16 %v149
  %v765 = vunpack.c.h.b16 %v149
  %v766 = vunpack.c.l.b16 %v150
  %v767 = vunpack.c.h.b16 %v150
  %v768 = vunpack.c.l.b16 %v151
  %v769 = vunpack.c.h.b16 %v151
  %v770 = vunpack.c.l.b16 %v152
  %v771 = vunpack.c.h.b16 %v152
  %v772 = vunpack.c.l.b16 %v153
  %v773 = vunpack.c.h.b16 %v153
  %v774 = vunpack.c.l.b16 %v154
  %v775 = vunpack.c.h.b16 %v154
  %v776 = vunpack.c.l.b16 %v155
  %v777 = vunpack.c.h.b16 %v155
  %v778 = vunpack.c.l.b16 %v156
  %v779 = vunpack.c.h.b16 %v156
  %v780 = vunpack.c.l.b16 %v157
  %v781 = vunpack.c.h.b16 %v157
  %v782 = vunpack.c.l.b16 %v158
  %v783 = vunpack.c.h.b16 %v158
  %v784 = vunpack.c.l.b16 %v159
  %v785 = vunpack.c.h.b16 %v159
  %v786 = vunpack.c.l.b16 %v160
  %v787 = vunpack.c.h.b16 %v160
  %v788 = vunpack.c.l.b16 %v161
  %v789 = vunpack.c.h.b16 %v161
  %v790 = vunpack.c.l.b16 %v162
  %v791 = vunpack.c.h.b16 %v162
  %v792 = vunpack.c.l.b16 %v163
  %v793 = vunpack.c.h.b16 %v163
  %v794 = vunpack.c.l.b16 %v164
  %v795 = vunpack.c.h.b16 %v164
  %v796 = vunpack.c.l.b16 %v165
  %v797 = vunpack.c.h.b16 %v165
  %v798 = vunpack.c.l.b16 %v166
  %v799 = vunpack.c.h.b16 %v166
  %v800 = vunpack.c.l.b16 %v167
  %v801 = vunpack.c.h.b16 %v167
  %v802 = vunpack.c.l.b16 %v168
  %v803 = vunpack.c.h.b16 %v168
  %v804 = vunpack.c.l.b16 %v169
  %v805 = vunpack.c.h.b16 %v169
  %v806 = vunpack.c.l.b16 %v170
  %v807 = vunpack.c.h.b16 %v170
  %v808 = vunpack.c.l.b16 %v171
  %v809 = vunpack.c.h.b16 %v171
  %v810 = vunpack.c.l.b16 %v172
  %v811 = vunpack.c.h.b16 %v172
  %v812 = vunpack.c.l.b16 %v173
  %v813 = vunpack.c.h.b16 %v173
  %v814 = vunpack.c.l.b16 %v174
  %v815 = vunpack.c.h.b16 %v174
  %v816 = vunpack.c.l.b16 %v175
  %v817 = vunpack.c.h.b16 %v175
  %v818 = vunpack.c.l.b16 %v176
  %v819 = vunpack.c.h.b16 %v176
  %v820 = vunpack.c.l.b16 %v177
  %v821 = vunpack.c.h.b16 %v177
  %v822 = vunpack.c.l.b16 %v178
  %v823 = vunpack.c.h.b16 %v178
  %v824 = vunpack.c.l.b16 %v179
  %v825 = vunpack.c.h.b16 %v179
  %v826 = vunpack.c.l.b16 %v180
  %v827 = vunpack.c.h.b16 %v180
  %v828 = vunpack.c.l.b16 %v181
  %v829 = vunpack.c.h.b16 %v181
  %v830 = vunpack.c.l.b16 %v182
  %v831 = vunpack.c.h.b16 %v182
  %v832 = vunpack.c.l.b16 %v183
  %v833 = vunpack.c.h.b16 %v183
  %v834 = vunpack.c.l.b16 %v184
  %v835 = vunpack.c.h.b16 %v184
  %v836 = vunpack.c.l.b16 %v185
  %v837 = vunpack.c.h.b16 %v185
  %v838 = vunpack.c.l.b16 %v186
  %v839 = vunpack.c.h.b16 %v186
  %v840 = vunpack.c.l.b16 %v187
  %v841 = vunpack.c.h.b16 %v187
  %v842 = vunpack.c.l.b16 %v188
  %v843 = vunpack.c.h.b16 %v188
  %v844 = vunpack.c.l.b16 %v189
  %v845 = vunpack.c.h.b16 %v189
  %v846 = vunpack.c.l.b16 %v190
  %v847 = vunpack.c.h.b16 %v190
  %v848 = vunpack.c.l.b16 %v191
  %v849 = vunpack.c.h.b16 %v191
  %v850 = vunpack.c.l.b16 %v192
  %v851 = vunpack.c.h.b16 %v192
  %v852 = vunpack.c.l.b16 %v193
  %v853 = vunpack.c.h.b16 %v193
  %v854 = vunpack.c.l.b16 %v194
  %v855 = vunpack.c.h.b16 %v194
  %v856 = vunpack.c.l.b16 %v195
  %v857 = vunpack.c.h.b16 %v195
  %v858 = vunpack.c.l.b16 %v196
  %v859 = vunpack.c.h.b16 %v196
  %v860 = vunpack.c.l.b16 %v197
  %v861 = vunpack.c.h.b16 %v197
  %v862 = vunpack.c.l.b16 %v198
  %v863 = vunpack.c.h.b16 %v198
  %v864 = vunpack.c.l.b16 %v199
  %v865 = vunpack.c.h.b16 %v199
  %v866 = vunpack.c.l.b16 %v200
  %v867 = vunpack.c.h.b16 %v200
  %v868 = vunpack.c.l.b16 %v201
  %v869 = vunpack.c.h.b16 %v201
  %v870 = vunpack.c.l.b16 %v202
  %v871 = vunpack.c.h.b16 %v202
  %v872 = vunpack.c.l.b16 %v203
  %v873 = vunpack.c.h.b16 %v203
  %v874 = vunpack.c.l.b16 %v204
  %v875 = vunpack.c.h.b16 %v204
  %v876 = vunpack.c.l.b16 %v205
  %v877 = vunpack.c.h.b16 %v205
  %v878 = vunpack.c.l.b16 %v206
  %v879 = vunpack.c.h.b16 %v206
  %v880 = vunpack.c.l.b16 %v207
  %v881 = vunpack.c.h.b16 %v207
  %v882 = vunpack.c.l.b16 %v208
  %v883 = vunpack.c.h.b16 %v208
  %v884 = vunpack.c.l.b16 %v209
  %v885 = vunpack.c.h.b16 %v209
  %v886 = vunpack.c.l.b16 %v210
  %v887 = vunpack.c.h.b16 %v210
  %v888 = vunpack.c.l.b16 %v211
  %v889 = vunpack.c.h.b16 %v211
  %v890 = vunpack.c.l.b16 %v212
  %v891 = vunpack.c.h.b16 %v212
  %v892 = vunpack.c.l.b16 %v213
  %v893 = vunpack.c.h.b16 %v213
  %v894 = vunpack.c.l.b16 %v214
  %v895 = vunpack.c.h.b16 %v214
  %v896 = vunpack.c.l.b16 %v215
  %v897 = vunpack.c.h.b16 %v215
  %v898 = vunpack.c.l.b16 %v216
  %v899 = vunpack.c.h.b16 %v216
  %v900 = vunpack.c.l.b16 %v217
  %v901 = vunpack.c.h.b16 %v217
  %v902 = vunpack.c.l.b16 %v218
  %v903 = vunpack.c.h.b16 %v218
  %v904 = vunpack.c.l.b16 %v219
  %v905 = vunpack.c.h.b16 %v219
  %v906 = vunpack.c.l.b16 %v220
  %v907 = vunpack.c.h.b16 %v220
  %v908 = vunpack.c.l.b16 %v221
  %v909 = vunpack.c.h.b16 %v221
  %v910 = vunpack.c.l.b16 %v222
  %v911 = vunpack.c.h.b16 %v222
  %v912 = vunpack.c.l.b16 %v223
  %v913 = vunpack.c.h.b16 %v223
  %v914 = vunpack.c.l.b16 %v224
  %v915 = vunpack.c.h.b16 %v224
  %v916 = vunpack.c.l.b16 %v225
  %v917 = vunpack.c.h.b16 %v225
  %v918 = vunpack.c.l.b16 %v226
  %v919 = vunpack.c.h.b16 %v226
  %v920 = vunpack.c.l.b16 %v227
  %v921 = vunpack.c.h.b16 %v227
  %v922 = vunpack.c.l.b16 %v228
  %v923 = vunpack.c.h.b16 %v228
  %v924 = vunpack.c.l.b16 %v229
  %v925 = vunpack.c.h.b16 %v229
  %v926 = vunpack.c.l.b16 %v230
  %v927 = vunpack.c.h.b16 %v230
  %v928 = vunpack.c.l.b16 %v231
  %v929 = vunpack.c.h.b16 %v231
  %v930 = vunpack.c.l.b16 %v232
  %v931 = vunpack.c.h.b16 %v232
  %v932 = vunpack.c.l.b16 %v233
  %v933 = vunpack.c.h.b16 %v233
  %v934 = vunpack.c.l.b16 %v234
  %v935 = vunpack.c.h.b16 %v234
  %v936 = vunpack.c.l.b16 %v235
  %v937 = vunpack.c.h.b16 %v235
  %v938 = vunpack.c.l.b16 %v236
  %v939 = vunpack.c.h.b16 %v236
  %v940 = vunpack.c.l.b16 %v237
  %v941 = vunpack.c.h.b16 %v237
  %v942 = vunpack.c.l.b16 %v238
  %v943 = vunpack.c.h.b16 %v238
  %v944 = vunpack.c.l.b16 %v239
  %v945 = vunpack.c.h.b16 %v239
  %v946 = vunpack.c.l.b16 %v240
  %v947 = vunpack.c.h.b16 %v240
  %v948 = vunpack.c.l.b16 %v241
  %v949 = vunpack.c.h.b16 %v241
  %v950 = vunpack.c.l.b16 %v242
  %v951 = vunpack.c.h.b16 %v242
  %v952 = vunpack.c.l.b16 %v243
  %v953 = vunpack.c.h.b16 %v243
  %v954 = vunpack.c.l.b16 %v244
  %v955 = vunpack.c.h.b16 %v244
  %v956 = vunpack.c.l.b16 %v245
  %v957 = vunpack.c.h.b16 %v245
  %v958 = vunpack.c.l.b16 %v246
  %v959 = vunpack.c.h.b16 %v246
  %v960 = vunpack.c.l.b16 %v247
  %v961 = vunpack.c.h.b16 %v247
  %v962 = vunpack.c.l.b16 %v248
  %v963 = vunpack.c.h.b16 %v248
  %v964 = vunpack.c.l.b16 %v249
  %v965 = vunpack.c.h.b16 %v249
  %v966 = vunpack.c.l.b16 %v250
  %v967 = vunpack.c.h.b16 %v250
  %v968 = vunpack.c.l.b16 %v251
  %v969 = vunpack.c.h.b16 %v251
  %v970 = vunpack.c.l.b16 %v252
  %v971 = vunpack.c.h.b16 %v252
  %v972 = vunpack.c.l.b16 %v253
  %v973 = vunpack.c.h.b16 %v253
  %v974 = vunpack.c.l.b16 %v254
  %v975 = vunpack.c.h.b16 %v254
  %v976 = vunpack.c.l.b16 %v255
  %v977 = vunpack.c.h.b16 %v255
  %v978 = vunpack.c.l.b16 %v256
  %v979 = vunpack.c.h.b16 %v256
  %v980 = vunpack.c.l.b16 %v257
  %v981 = vunpack.c.h.b16 %v257
  %v982 = vunpack.c.l.b16 %v258
  %v983 = vunpack.c.h.b16 %v258
  %v984 = vunpack.c.l.b16 %v259
  %v985 = vunpack.c.h.b16 %v259
  %v986 = vunpack.c.l.b16 %v260
  %v987 = vunpack.c.h.b16 %v260
  %v988 = vunpack.c.l.b16 %v261
  %v989 = vunpack.c.h.b16 %v261
  %v990 = vunpack.c.l.b16 %v262
  %v991 = vunpack.c.h.b16 %v262
  %v992 = vunpack.c.l.b16 %v263
  %v993 = vunpack.c.h.b16 %v263
  %v994 = vunpack.c.l.b16 %v264
  %v995 = vunpack.c.h.b16 %v264
  %v996 = vunpack.c.l.b16 %v265
  %v997 = vunpack.c.h.b16 %v265
  %v998 = vunpack.c.l.b16 %v266
  %v999 = vunpack.c.h.b16 %v266
  %v1000 = vunpack.c.l.b16 %v267
  %v1001 = vunpack.c.h.b16 %v267
  %v1002 = vunpack.c.l.b16 %v268
  %v1003 = vunpack.c.h.b16 %v268
  %v1004 = vunpack.c.l.b16 %v269
  %v1005 = vunpack.c.h.b16 %v269
  %v1006 = vunpack.c.l.b16 %v270
  %v1007 = vunpack.c.h.b16 %v270
  %v1008 = vunpack.c.l.b16 %v271
  %v1009 = vunpack.c.h.b16 %v271
  %v1010 = vunpack.c.l.b16 %v272
  %v1011 = vunpack.c.h.b16 %v272
  %v1012 = vunpack.c.l.b16 %v273
  %v1013 = vunpack.c.h.b16 %v273
  %v1014 = vunpack.c.l.b16 %v274
  %v1015 = vunpack.c.h.b16 %v274
  %v1016 = vunpack.c.l.b16 %v275
  %v1017 = vunpack.c.h.b16 %v275
  %v1018 = vunpack.c.l.b16 %v276
  %v1019 = vunpack.c.h.b16 %v276
  %v1020 = vunpack.c.l.b16 %v277
  %v1021 = vunpack.c.h.b16 %v277
  %v1022 = vunpack.c.l.b16 %v278
  %v1023 = vunpack.c.h.b16 %v278
  %v1024 = vunpack.c.l.b16 %v279
  %v1025 = vunpack.c.h.b16 %v279
  %v1026 = vunpack.c.l.b16 %v280
  %v1027 = vunpack.c.h.b16 %v280
  %v1028 = vunpack.c.l.b16 %v281
  %v1029 = vunpack.c.h.b16 %v281
  %v1030 = vunpack.c.l.b16 %v282
  %v1031 = vunpack.c.h.b16 %v282
  %v1032 = vunpack.c.l.b16 %v283
  %v1033 = vunpack.c.h.b16 %v283
  %v1034 = vunpack.c.l.b16 %v284
  %v1035 = vunpack.c.h.b16 %v284
  %v1036 = vunpack.c.l.b16 %v285
  %v1037 = vunpack.c.h.b16 %v285
  %v1038 = vunpack.c.l.b16 %v286
  %v1039 = vunpack.c.h.b16 %v286
  %v1040 = vunpack.c.l.b16 %v287
  %v1041 = vunpack.c.h.b16 %v287
  %v1042 = vunpack.c.l.b16 %v288
  %v1043 = vunpack.c.h.b16 %v288
  %v1044 = vunpack.c.l.b16 %v289
  %v1045 = vunpack.c.h.b16 %v289
  %v1046 = vunpack.c.l.b16 %v290
  %v1047 = vunpack.c.h.b16 %v290
  %v1048 = vunpack.c.l.b16 %v291
  %v1049 = vunpack.c.h.b16 %v291
  %v1050 = vunpack.c.l.b16 %v292
  %v1051 = vunpack.c.h.b16 %v292
  %v1052 = vunpack.c.l.b16 %v293
  %v1053 = vunpack.c.h.b16 %v293
  %v1054 = vunpack.c.l.b16 %v294
  %v1055 = vunpack.c.h.b16 %v294
  %v1056 = vunpack.c.l.b16 %v295
  %v1057 = vunpack.c.h.b16 %v295
  %v1058 = vunpack.c.l.b16 %v296
  %v1059 = vunpack.c.h.b16 %v296
  %v1060 = vunpack.c.l.b16 %v297
  %v1061 = vunpack.c.h.b16 %v297
  %v1062 = vunpack.c.l.b16 %v298
  %v1063 = vunpack.c.h.b16 %v298
  %v1064 = vunpack.c.l.b16 %v299
  %v1065 = vunpack.c.h.b16 %v299
  %v1066 = vunpack.c.l.b16 %v300
  %v1067 = vunpack.c.h.b16 %v300
  %v1068 = vunpack.c.l.b16 %v301
  %v1069 = vunpack.c.h.b16 %v301
  %v1070 = vunpack.c.l.b16 %v302
  %v1071 = vunpack.c.h.b16 %v302
  %v1072 = vunpack.c.l.b16 %v303
  %v1073 = vunpack.c.h.b16 %v303
  %v1074 = vunpack.c.l.b16 %v304
  %v1075 = vunpack.c.h.b16 %v304
  %v1076 = vunpack.c.l.b16 %v305
  %v1077 = vunpack.c.h.b16 %v305
  %v1078 = vunpack.c.l.b16 %v306
  %v1079 = vunpack.c.h.b16 %v306
  %v1080 = vunpack.c.l.b16 %v307
  %v1081 = vunpack.c.h.b16 %v307
  %v1082 = vunpack.c.l.b16 %v308
  %v1083 = vunpack.c.h.b16 %v308
  %v1084 = vunpack.c.l.b16 %v309
  %v1085 = vunpack.c.h.b16 %v309
  %v1086 = vunpack.c.l.b16 %v310
  %v1087 = vunpack.c.h.b16 %v310
  %v1088 = vunpack.c.l.b16 %v311
  %v1089 = vunpack.c.h.b16 %v311
  %v1090 = vpack.c.b16 %v582, %v578
  %v1091 = vpack.c.b16 %v583, %v579
  %v1092 = vpack.c.b16 %v584, %v580
  %v1093 = vpack.c.b16 %v585, %v581
  %v1094 = vpack.c.b16 %v590, %v586
  %v1095 = vpack.c.b16 %v591, %v587
  %v1096 = vpack.c.b16 %v592, %v588
  %v1097 = vpack.c.b16 %v593, %v589
  %v1098 = vpack.c.b16 %v598, %v594
  %v1099 = vpack.c.b16 %v599, %v595
  %v1100 = vpack.c.b16 %v600, %v596
  %v1101 = vpack.c.b16 %v601, %v597
  %v1102 = vpack.c.b16 %v606, %v602
  %v1103 = vpack.c.b16 %v607, %v603
  %v1104 = vpack.c.b16 %v608, %v604
  %v1105 = vpack.c.b16 %v609, %v605
  %v1106 = vpack.c.b16 %v614, %v610
  %v1107 = vpack.c.b16 %v615, %v611
  %v1108 = vpack.c.b16 %v616, %v612
  %v1109 = vpack.c.b16 %v617, %v613
  %v1110 = vpack.c.b16 %v622, %v618
  %v1111 = vpack.c.b16 %v623, %v619
  %v1112 = vpack.c.b16 %v624, %v620
  %v1113 = vpack.c.b16 %v625, %v621
  %v1114 = vpack.c.b16 %v630, %v626
  %v1115 = vpack.c.b16 %v631, %v627
  %v1116 = vpack.c.b16 %v632, %v628
  %v1117 = vpack.c.b16 %v633, %v629
  %v1118 = vpack.c.b16 %v638, %v634
  %v1119 = vpack.c.b16 %v639, %v635
  %v1120 = vpack.c.b16 %v640, %v636
  %v1121 = vpack.c.b16 %v641, %v637
  %v1122 = vpack.c.b16 %v646, %v642
  %v1123 = vpack.c.b16 %v647, %v643
  %v1124 = vpack.c.b16 %v648, %v644
  %v1125 = vpack.c.b16 %v649, %v645
  %v1126 = vpack.c.b16 %v654, %v650
  %v1127 = vpack.c.b16 %v655, %v651
  %v1128 = vpack.c.b16 %v656, %v652
  %v1129 = vpack.c.b16 %v657, %v653
  %v1130 = vpack.c.b16 %v662, %v658
  %v1131 = vpack.c.b16 %v663, %v659
  %v1132 = vpack.c.b16 %v664, %v660
  %v1133 = vpack.c.b16 %v665, %v661
  %v1134 = vpack.c.b16 %v670, %v666
  %v1135 = vpack.c.b16 %v671, %v667
  %v1136 = vpack.c.b16 %v672, %v668
  %v1137 = vpack.c.b16 %v673, %v669
  %v1138 = vpack.c.b16 %v678, %v674
  %v1139 = vpack.c.b16 %v679, %v675
  %v1140 = vpack.c.b16 %v680, %v676
  %v1141 = vpack.c.b16 %v681, %v677
  %v1142 = vpack.c.b16 %v686, %v682
  %v1143 = vpack.c.b16 %v687, %v683
  %v1144 = vpack.c.b16 %v688, %v684
  %v1145 = vpack.c.b16 %v689, %v685
  %v1146 = vpack.c.b16 %v694, %v690
  %v1147 = vpack.c.b16 %v695, %v691
  %v1148 = vpack.c.b16 %v696, %v692
  %v1149 = vpack.c.b16 %v697, %v693
  %v1150 = vpack.c.b16 %v702, %v698
  %v1151 = vpack.c.b16 %v703, %v699
  %v1152 = vpack.c.b16 %v704, %v700
  %v1153 = vpack.c.b16 %v705, %v701
  %v1154 = vpack.c.b16 %v710, %v706
  %v1155 = vpack.c.b16 %v711, %v707
  %v1156 = vpack.c.b16 %v712, %v708
  %v1157 = vpack.c.b16 %v713, %v709
  %v1158 = vpack.c.b16 %v718, %v714
  %v1159 = vpack.c.b16 %v719, %v715
  %v1160 = vpack.c.b16 %v720, %v716
  %v1161 = vpack.c.b16 %v721, %v717
  %v1162 = vpack.c.b16 %v726, %v722
  %v1163 = vpack.c.b16 %v727, %v723
  %v1164 = vpack.c.b16 %v728, %v724
  %v1165 = vpack.c.b16 %v729, %v725
  %v1166 = vpack.c.b16 %v734, %v730
  %v1167 = vpack.c.b16 %v735, %v731
  %v1168 = vpack.c.b16 %v736, %v732
  %v1169 = vpack.c.b16 %v737, %v733
  %v1170 = vpack.c.b16 %v742, %v738
  %v1171 = vpack.c.b16 %v743, %v739
  %v1172 = vpack.c.b16 %v744, %v740
  %v1173 = vpack.c.b16 %v745, %v741
  %v1174 = vpack.c.b16 %v750, %v746
  %v1175 = vpack.c.b16 %v751, %v747
  %v1176 = vpack.c.b16 %v752, %v748
  %v1177 = vpack.c.b16 %v753, %v749
  %v1178 = vpack.c.b16 %v758, %v754
  %v1179 = vpack.c.b16 %v759, %v755
  %v1180 = vpack.c.b16 %v760, %v756
  %v1181 = vpack.c.b16 %v761, %v757
  %v1182 = vpack.c.b16 %v766, %v762
  %v1183 = vpack.c.b16 %v767, %v763
  %v1184 = vpack.c.b16 %v768, %v764
  %v1185 = vpack.c.b16 %v769, %v765
  %v1186 = vpack.c.b16 %v774, %v770
  %v1187 = vpack.c.b16 %v775, %v771
  %v1188 = vpack.c.b16 %v776, %v772
  %v1189 = vpack.c.b16 %v777, %v773
  %v1190 = vpack.c.b16 %v782, %v778
  %v1191 = vpack.c.b16 %v783, %v779
  %v1192 = vpack.c.b16 %v784, %v780
  %v1193 = vpack.c.b16 %v785, %v781
  %v1194 = vpack.c.b16 %v790, %v786
  %v1195 = vpack.c.b16 %v791, %v787
  %v1196 = vpack.c.b16 %v792, %v788
  %v1197 = vpack.c.b16 %v793, %v789
  %v1198 = vpack.c.b16 %v798, %v794
  %v1199 = vpack.c.b16 %v799, %v795
  %v1200 = vpack.c.b16 %v800, %v796
  %v1201 = vpack.c.b16 %v801, %v797
  %v1202 = vpack.c.b16 %v806, %v802
  %v1203 = vpack.c.b16 %v807, %v803
  %v1204 = vpack.c.b16 %v808, %v804
  %v1205 = vpack.c.b16 %v809, %v805
  %v1206 = vpack.c.b16 %v814, %v810
  %v1207 = vpack.c.b16 %v815, %v811
  %v1208 = vpack.c.b16 %v816, %v812
  %v1209 = vpack.c.b16 %v817, %v813
  %v1210 = vpack.c.b16 %v822, %v818
  %v1211 = vpack.c.b16 %v823, %v819
  %v1212 = vpack.c.b16 %v824, %v820
  %v1213 = vpack.c.b16 %v825, %v821
  %v1214 = vpack.c.b16 %v830, %v826
  %v1215 = vpack.c.b16 %v831, %v827
  %v1216 = vpack.c.b16 %v832, %v828
  %v1217 = vpack.c.b16 %v833, %v829
  %v1218 = vpack.c.b16 %v838, %v834
  %v1219 = vpack.c.b16 %v839, %v835
  %v1220 = vpack.c.b16 %v840, %v836
  %v1221 = vpack.c.b16 %v841, %v837
  %v1222 = vpack.c.b16 %v846, %v842
  %v1223 = vpack.c.b16 %v847, %v843
  %v1224 = vpack.c.b16 %v848, %v844
  %v1225 = vpack.c.b16 %v849, %v845
  %v1226 = vpack.c.b16 %v854, %v850
  %v1227 = vpack.c.b16 %v855, %v851
  %v1228 = vpack.c.b16 %v856, %v852
  %v1229 = vpack.c.b16 %v857, %v853
  %v1230 = vpack.c.b16 %v862, %v858
  %v1231 = vpack.c.b16 %v863, %v859
  %v1232 = vpack.c.b16 %v864, %v860
  %v1233 = vpack.c.b16 %v865, %v861
  %v1234 = vpack.c.b16 %v870, %v866
  %v1235 = vpack.c.b16 %v871, %v867
  %v1236 = vpack.c.b16 %v872, %v868
  %v1237 = vpack.c.b16 %v873, %v869
  %v1238 = vpack.c.b16 %v878, %v874
  %v1239 = vpack.c.b16 %v879, %v875
  %v1240 = vpack.c.b16 %v880, %v876
  %v1241 = vpack.c.b16 %v881, %v877
  %v1242 = vpack.c.b16 %v886, %v882
  %v1243 = vpack.c.b16 %v887, %v883
  %v1244 = vpack.c.b16 %v888, %v884
  %v1245 = vpack.c.b16 %v889, %v885
  %v1246 = vpack.c.b16 %v894, %v890
  %v1247 = vpack.c.b16 %v895, %v891
  %v1248 = vpack.c.b16 %v896, %v892
  %v1249 = vpack.c.b16 %v897, %v893
  %v1250 = vpack.c.b16 %v902, %v898
  %v1251 = vpack.c.b16 %v903, %v899
  %v1252 = vpack.c.b16 %v904, %v900
  %v1253 = vpack.c.b16 %v905, %v901
  %v1254 = vpack.c.b16 %v910, %v906
  %v1255 = vpack.c.b16 %v911, %v907
  %v1256 = vpack.c.b16 %v912, %v908
  %v1257 = vpack.c.b16 %v913, %v909
  %v1258 = vpack.c.b16 %v918, %v914
  %v1259 = vpack.c.b16 %v919, %v915
  %v1260 = vpack.c.b16 %v920, %v916
  %v1261 = vpack.c.b16 %v921, %v917
  %v1262 = vpack.c.b16 %v926, %v922
  %v1263 = vpack.c.b16 %v927, %v923
  %v1264 = vpack.c.b16 %v928, %v924
  %v1265 = vpack.c.b16 %v929, %v925
  %v1266 = vpack.c.b16 %v934, %v930
  %v1267 = vpack.c.b16 %v935, %v931
  %v1268 = vpack.c.b16 %v936, %v932
  %v1269 = vpack.c.b16 %v937, %v933
  %v1270 = vpack.c.b16 %v942, %v938
  %v1271 = vpack.c.b16 %v943, %v939
  %v1272 = vpack.c.b16 %v944, %v940
  %v1273 = vpack.c.b16 %v945, %v941
  %v1274 = vpack.c.b16 %v950, %v946
  %v1275 = vpack.c.b16 %v951, %v947
  %v1276 = vpack.c.b16 %v952, %v948
  %v1277 = vpack.c.b16 %v953, %v949
  %v1278 = vpack.c.b16 %v958, %v954
  %v1279 = vpack.c.b16 %v959, %v955
  %v1280 = vpack.c.b16 %v960, %v956
  %v1281 = vpack.c.b16 %v961, %v957
  %v1282 = vpack.c.b16 %v966, %v962
  %v1283 = vpack.c.b16 %v967, %v963
  %v1284 = vpack.c.b16 %v968, %v964
  %v1285 = vpack.c.b16 %v969, %v965
  %v1286 = vpack.c.b16 %v974, %v970
  %v1287 = vpack.c.b16 %v975, %v971
  %v1288 = vpack.c.b16 %v976, %v972
  %v1289 = vpack.c.b16 %v977, %v973
  %v1290 = vpack.c.b16 %v982, %v978
  %v1291 = vpack.c.b16 %v983, %v979
  %v1292 = vpack.c.b16 %v984, %v980
  %v1293 = vpack.c.b16 %v985, %v981
  %v1294 = vpack.c.b16 %v990, %v986
  %v1295 = vpack.c.b16 %v991, %v987
  %v1296 = vpack.c.b16 %v992, %v988
  %v1297 = vpack.c.b16 %v993, %v989
  %v1298 = vpack.c.b16 %v998, %v994
  %v1299 = vpack.c.b16 %v999, %v995
  %v1300 = vpack.c.b16 %v1000, %v996
  %v1301 = vpack.c.b16 %v1001, %v997
  %v1302 = vpack.c.b16 %v1006, %v1002
  %v1303 = vpack.c.b16 %v1007, %v1003
  %v1304 = vpack.c.b16 %v1008, %v1004
  %v1305 = vpack.c.b16 %v1009, %v1005
  %v1306 = vpack.c.b16 %v1014, %v1010
  %v1307 = vpack.c.b16 %v1015, %v1011
  %v1308 = vpack.c.b16 %v1016, %v1012
  %v1309 = vpack.c.b16 %v1017, %v1013
  %v1310 = vpack.c.b16 %v1022, %v1018
  %v1311 = vpack.c.b16 %v1023, %v1019
  %v1312 = vpack.c.b16 %v1024, %v1020
  %v1313 = vpack.c.b16 %v1025, %v1021
  %v1314 = vpack.c.b16 %v1030, %v1026
  %v1315 = vpack.c.b16 %v1031, %v1027
  %v1316 = vpack.c.b16 %v1032, %v1028
  %v1317 = vpack.c.b16 %v1033, %v1029
  %v1318 = vpack.c.b16 %v1038, %v1034
  %v1319 = vpack.c.b16 %v1039, %v1035
  %v1320 = vpack.c.b16 %v1040, %v1036
  %v1321 = vpack.c.b16 %v1041, %v1037
  %v1322 = vpack.c.b16 %v1046, %v1042
  %v1323 = vpack.c.b16 %v1047, %v1043
  %v1324 = vpack.c.b16 %v1048, %v1044
  %v1325 = vpack.c.b16 %v1049, %v1045
  %v1326 = vpack.c.b16 %v1054, %v1050
  %v1327 = vpack.c.b16 %v1055, %v1051
  %v1328 = vpack.c.b16 %v1056, %v1052
  %v1329 = vpack.c.b16 %v1057, %v1053
  %v1330 = vpack.c.b16 %v1062, %v1058
  %v1331 = vpack.c.b16 %v1063, %v1059
  %v1332 = vpack.c.b16 %v1064, %v1060
  %v1333 = vpack.c.b16 %v1065, %v1061
  %v1334 = vpack.c.b16 %v1070, %v1066
  %v1335 = vpack.c.b16 %v1071, %v1067
  %v1336 = vpack.c.b16 %v1072, %v1068
  %v1337 = vpack.c.b16 %v1073, %v1069
  %v1338 = vpack.c.b16 %v1078, %v1074
  %v1339 = vpack.c.b16 %v1079, %v1075
  %v1340 = vpack.c.b16 %v1080, %v1076
  %v1341 = vpack.c.b16 %v1081, %v1077
  %v1342 = vpack.c.b16 %v1086, %v1082
  %v1343 = vpack.c.b16 %v1087, %v1083
  %v1344 = vpack.c.b16 %v1088, %v1084
  %v1345 = vpack.c.b16 %v1089, %v1085
  %1602 = vmatpush.bf16.msra.mxu0 %v1118
  %1603 = vmatpush.bf16.msra.mxu0 %v1114
  %1604 = vmatpush.bf16.msra.mxu0 %v1110
  %1605 = vmatpush.bf16.msra.mxu0 %v1106
  %1606 = vmatpush.bf16.msra.mxu0 %v1102
  %1607 = vmatpush.bf16.msra.mxu0 %v1098
  %1608 = vmatpush.bf16.msra.mxu0 %v1094
  %1609 = vmatpush.bf16.msra.mxu0 %v1090
  %1610 = vmatmul.bf16.gmra.mxu0 %v48
  %v1611 = vpop.f32.mrf.mxu0
  %v1612 = vadd.f32 %v314, %v1611
  %v1613 = vpop.f32.mrf.mxu0
  %v1614 = vadd.f32 %v314, %v1613
  %1615 = vdwg.mxu0
  %1616 = vmatpush.bf16.msra.mxu0 %v1150
  %1617 = vmatpush.bf16.msra.mxu0 %v1146
  %1618 = vmatpush.bf16.msra.mxu0 %v1142
  %1619 = vmatpush.bf16.msra.mxu0 %v1138
  %1620 = vmatpush.bf16.msra.mxu0 %v1134
  %1621 = vmatpush.bf16.msra.mxu0 %v1130
  %1622 = vmatpush.bf16.msra.mxu0 %v1126
  %1623 = vmatpush.bf16.msra.mxu0 %v1122
  %1624 = vmatmul.bf16.gmra.mxu0 %v49
  %v1625 = vpop.f32.mrf.mxu0
  %v1626 = vadd.f32 %v1612, %v1625
  %v1627 = vpop.f32.mrf.mxu0
  %v1628 = vadd.f32 %v1614, %v1627
  %1629 = vdwg.mxu0
  %1630 = vmatpush.bf16.msra.mxu0 %v1182
  %1631 = vmatpush.bf16.msra.mxu0 %v1178
  %1632 = vmatpush.bf16.msra.mxu0 %v1174
  %1633 = vmatpush.bf16.msra.mxu0 %v1170
  %1634 = vmatpush.bf16.msra.mxu0 %v1166
  %1635 = vmatpush.bf16.msra.mxu0 %v1162
  %1636 = vmatpush.bf16.msra.mxu0 %v1158
  %1637 = vmatpush.bf16.msra.mxu0 %v1154
  %1638 = vmatmul.bf16.gmra.mxu0 %v50
  %v1639 = vpop.f32.mrf.mxu0
  %v1640 = vadd.f32 %v1626, %v1639
  %v1641 = vpop.f32.mrf.mxu0
  %v1642 = vadd.f32 %v1628, %v1641
  %1643 = vdwg.mxu0
  %1644 = vmatpush.bf16.msra.mxu0 %v1214
  %1645 = vmatpush.bf16.msra.mxu0 %v1210
  %1646 = vmatpush.bf16.msra.mxu0 %v1206
  %1647 = vmatpush.bf16.msra.mxu0 %v1202
  %1648 = vmatpush.bf16.msra.mxu0 %v1198
  %1649 = vmatpush.bf16.msra.mxu0 %v1194
  %1650 = vmatpush.bf16.msra.mxu0 %v1190
  %1651 = vmatpush.bf16.msra.mxu0 %v1186
  %1652 = vmatmul.bf16.gmra.mxu0 %v51
  %v1653 = vpop.f32.mrf.mxu0
  %v1654 = vadd.f32 %v1640, %v1653
  %v1655 = vpop.f32.mrf.mxu0
  %v1656 = vadd.f32 %v1642, %v1655
  %1657 = vdwg.mxu0
  %1658 = vmatpush.bf16.msra.mxu0 %v1246
  %1659 = vmatpush.bf16.msra.mxu0 %v1242
  %1660 = vmatpush.bf16.msra.mxu0 %v1238
  %1661 = vmatpush.bf16.msra.mxu0 %v1234
  %1662 = vmatpush.bf16.msra.mxu0 %v1230
  %1663 = vmatpush.bf16.msra.mxu0 %v1226
  %1664 = vmatpush.bf16.msra.mxu0 %v1222
  %1665 = vmatpush.bf16.msra.mxu0 %v1218
  %1666 = vmatmul.bf16.gmra.mxu0 %v52
  %v1667 = vpop.f32.mrf.mxu0
  %v1668 = vadd.f32 %v1654, %v1667
  %v1669 = vpop.f32.mrf.mxu0
  %v1670 = vadd.f32 %v1656, %v1669
  %1671 = vdwg.mxu0
  %1672 = vmatpush.bf16.msra.mxu0 %v1278
  %1673 = vmatpush.bf16.msra.mxu0 %v1274
  %1674 = vmatpush.bf16.msra.mxu0 %v1270
  %1675 = vmatpush.bf16.msra.mxu0 %v1266
  %1676 = vmatpush.bf16.msra.mxu0 %v1262
  %1677 = vmatpush.bf16.msra.mxu0 %v1258
  %1678 = vmatpush.bf16.msra.mxu0 %v1254
  %1679 = vmatpush.bf16.msra.mxu0 %v1250
  %1680 = vmatmul.bf16.gmra.mxu0 %v53
  %v1681 = vpop.f32.mrf.mxu0
  %v1682 = vadd.f32 %v1668, %v1681
  %v1683 = vpop.f32.mrf.mxu0
  %v1684 = vadd.f32 %v1670, %v1683
  %1685 = vdwg.mxu0
  %1686 = vmatpush.bf16.msra.mxu0 %v1310
  %1687 = vmatpush.bf16.msra.mxu0 %v1306
  %1688 = vmatpush.bf16.msra.mxu0 %v1302
  %1689 = vmatpush.bf16.msra.mxu0 %v1298
  %1690 = vmatpush.bf16.msra.mxu0 %v1294
  %1691 = vmatpush.bf16.msra.mxu0 %v1290
  %1692 = vmatpush.bf16.msra.mxu0 %v1286
  %1693 = vmatpush.bf16.msra.mxu0 %v1282
  %1694 = vmatmul.bf16.gmra.mxu0 %v54
  %v1695 = vpop.f32.mrf.mxu0
  %v1696 = vadd.f32 %v1682, %v1695
  %v1697 = vpop.f32.mrf.mxu0
  %v1698 = vadd.f32 %v1684, %v1697
  %1699 = vdwg.mxu0
  %1700 = vmatpush.bf16.msra.mxu0 %v1342
  %1701 = vmatpush.bf16.msra.mxu0 %v1338
  %1702 = vmatpush.bf16.msra.mxu0 %v1334
  %1703 = vmatpush.bf16.msra.mxu0 %v1330
  %1704 = vmatpush.bf16.msra.mxu0 %v1326
  %1705 = vmatpush.bf16.msra.mxu0 %v1322
  %1706 = vmatpush.bf16.msra.mxu0 %v1318
  %1707 = vmatpush.bf16.msra.mxu0 %v1314
  %1708 = vmatmul.bf16.gmra.mxu0 %v55
  %v1709 = vpop.f32.mrf.mxu0
  %v1710 = vadd.f32 %v1696, %v1709
  %v1711 = vpop.f32.mrf.mxu0
  %v1712 = vadd.f32 %v1698, %v1711
  %1713 = vdwg.mxu0
  %1714 = vmatpush.bf16.msra.mxu0 %v1119
  %1715 = vmatpush.bf16.msra.mxu0 %v1115
  %1716 = vmatpush.bf16.msra.mxu0 %v1111
  %1717 = vmatpush.bf16.msra.mxu0 %v1107
  %1718 = vmatpush.bf16.msra.mxu0 %v1103
  %1719 = vmatpush.bf16.msra.mxu0 %v1099
  %1720 = vmatpush.bf16.msra.mxu0 %v1095
  %1721 = vmatpush.bf16.msra.mxu0 %v1091
  %1722 = vmatmul.bf16.gmra.mxu0 %v48
  %v1723 = vpop.f32.mrf.mxu0
  %v1724 = vadd.f32 %v315, %v1723
  %v1725 = vpop.f32.mrf.mxu0
  %v1726 = vadd.f32 %v315, %v1725
  %1727 = vdwg.mxu0
  %1728 = vmatpush.bf16.msra.mxu0 %v1151
  %1729 = vmatpush.bf16.msra.mxu0 %v1147
  %1730 = vmatpush.bf16.msra.mxu0 %v1143
  %1731 = vmatpush.bf16.msra.mxu0 %v1139
  %1732 = vmatpush.bf16.msra.mxu0 %v1135
  %1733 = vmatpush.bf16.msra.mxu0 %v1131
  %1734 = vmatpush.bf16.msra.mxu0 %v1127
  %1735 = vmatpush.bf16.msra.mxu0 %v1123
  %1736 = vmatmul.bf16.gmra.mxu0 %v49
  %v1737 = vpop.f32.mrf.mxu0
  %v1738 = vadd.f32 %v1724, %v1737
  %v1739 = vpop.f32.mrf.mxu0
  %v1740 = vadd.f32 %v1726, %v1739
  %1741 = vdwg.mxu0
  %1742 = vmatpush.bf16.msra.mxu0 %v1183
  %1743 = vmatpush.bf16.msra.mxu0 %v1179
  %1744 = vmatpush.bf16.msra.mxu0 %v1175
  %1745 = vmatpush.bf16.msra.mxu0 %v1171
  %1746 = vmatpush.bf16.msra.mxu0 %v1167
  %1747 = vmatpush.bf16.msra.mxu0 %v1163
  %1748 = vmatpush.bf16.msra.mxu0 %v1159
  %1749 = vmatpush.bf16.msra.mxu0 %v1155
  %1750 = vmatmul.bf16.gmra.mxu0 %v50
  %v1751 = vpop.f32.mrf.mxu0
  %v1752 = vadd.f32 %v1738, %v1751
  %v1753 = vpop.f32.mrf.mxu0
  %v1754 = vadd.f32 %v1740, %v1753
  %1755 = vdwg.mxu0
  %1756 = vmatpush.bf16.msra.mxu0 %v1215
  %1757 = vmatpush.bf16.msra.mxu0 %v1211
  %1758 = vmatpush.bf16.msra.mxu0 %v1207
  %1759 = vmatpush.bf16.msra.mxu0 %v1203
  %1760 = vmatpush.bf16.msra.mxu0 %v1199
  %1761 = vmatpush.bf16.msra.mxu0 %v1195
  %1762 = vmatpush.bf16.msra.mxu0 %v1191
  %1763 = vmatpush.bf16.msra.mxu0 %v1187
  %1764 = vmatmul.bf16.gmra.mxu0 %v51
  %v1765 = vpop.f32.mrf.mxu0
  %v1766 = vadd.f32 %v1752, %v1765
  %v1767 = vpop.f32.mrf.mxu0
  %v1768 = vadd.f32 %v1754, %v1767
  %1769 = vdwg.mxu0
  %1770 = vmatpush.bf16.msra.mxu0 %v1247
  %1771 = vmatpush.bf16.msra.mxu0 %v1243
  %1772 = vmatpush.bf16.msra.mxu0 %v1239
  %1773 = vmatpush.bf16.msra.mxu0 %v1235
  %1774 = vmatpush.bf16.msra.mxu0 %v1231
  %1775 = vmatpush.bf16.msra.mxu0 %v1227
  %1776 = vmatpush.bf16.msra.mxu0 %v1223
  %1777 = vmatpush.bf16.msra.mxu0 %v1219
  %1778 = vmatmul.bf16.gmra.mxu0 %v52
  %v1779 = vpop.f32.mrf.mxu0
  %v1780 = vadd.f32 %v1766, %v1779
  %v1781 = vpop.f32.mrf.mxu0
  %v1782 = vadd.f32 %v1768, %v1781
  %1783 = vdwg.mxu0
  %1784 = vmatpush.bf16.msra.mxu0 %v1279
  %1785 = vmatpush.bf16.msra.mxu0 %v1275
  %1786 = vmatpush.bf16.msra.mxu0 %v1271
  %1787 = vmatpush.bf16.msra.mxu0 %v1267
  %1788 = vmatpush.bf16.msra.mxu0 %v1263
  %1789 = vmatpush.bf16.msra.mxu0 %v1259
  %1790 = vmatpush.bf16.msra.mxu0 %v1255
  %1791 = vmatpush.bf16.msra.mxu0 %v1251
  %1792 = vmatmul.bf16.gmra.mxu0 %v53
  %v1793 = vpop.f32.mrf.mxu0
  %v1794 = vadd.f32 %v1780, %v1793
  %v1795 = vpop.f32.mrf.mxu0
  %v1796 = vadd.f32 %v1782, %v1795
  %1797 = vdwg.mxu0
  %1798 = vmatpush.bf16.msra.mxu0 %v1311
  %1799 = vmatpush.bf16.msra.mxu0 %v1307
  %1800 = vmatpush.bf16.msra.mxu0 %v1303
  %1801 = vmatpush.bf16.msra.mxu0 %v1299
  %1802 = vmatpush.bf16.msra.mxu0 %v1295
  %1803 = vmatpush.bf16.msra.mxu0 %v1291
  %1804 = vmatpush.bf16.msra.mxu0 %v1287
  %1805 = vmatpush.bf16.msra.mxu0 %v1283
  %1806 = vmatmul.bf16.gmra.mxu0 %v54
  %v1807 = vpop.f32.mrf.mxu0
  %v1808 = vadd.f32 %v1794, %v1807
  %v1809 = vpop.f32.mrf.mxu0
  %v1810 = vadd.f32 %v1796, %v1809
  %1811 = vdwg.mxu0
  %1812 = vmatpush.bf16.msra.mxu0 %v1343
  %1813 = vmatpush.bf16.msra.mxu0 %v1339
  %1814 = vmatpush.bf16.msra.mxu0 %v1335
  %1815 = vmatpush.bf16.msra.mxu0 %v1331
  %1816 = vmatpush.bf16.msra.mxu0 %v1327
  %1817 = vmatpush.bf16.msra.mxu0 %v1323
  %1818 = vmatpush.bf16.msra.mxu0 %v1319
  %1819 = vmatpush.bf16.msra.mxu0 %v1315
  %1820 = vmatmul.bf16.gmra.mxu0 %v55
  %v1821 = vpop.f32.mrf.mxu0
  %v1822 = vadd.f32 %v1808, %v1821
  %v1823 = vpop.f32.mrf.mxu0
  %v1824 = vadd.f32 %v1810, %v1823
  %1825 = vdwg.mxu0
  %1826 = vmatpush.bf16.msra.mxu0 %v1120
  %1827 = vmatpush.bf16.msra.mxu0 %v1116
  %1828 = vmatpush.bf16.msra.mxu0 %v1112
  %1829 = vmatpush.bf16.msra.mxu0 %v1108
  %1830 = vmatpush.bf16.msra.mxu0 %v1104
  %1831 = vmatpush.bf16.msra.mxu0 %v1100
  %1832 = vmatpush.bf16.msra.mxu0 %v1096
  %1833 = vmatpush.bf16.msra.mxu0 %v1092
  %1834 = vmatmul.bf16.gmra.mxu0 %v48
  %v1835 = vpop.f32.mrf.mxu0
  %v1836 = vadd.f32 %v316, %v1835
  %v1837 = vpop.f32.mrf.mxu0
  %v1838 = vadd.f32 %v316, %v1837
  %1839 = vdwg.mxu0
  %1840 = vmatpush.bf16.msra.mxu0 %v1152
  %1841 = vmatpush.bf16.msra.mxu0 %v1148
  %1842 = vmatpush.bf16.msra.mxu0 %v1144
  %1843 = vmatpush.bf16.msra.mxu0 %v1140
  %1844 = vmatpush.bf16.msra.mxu0 %v1136
  %1845 = vmatpush.bf16.msra.mxu0 %v1132
  %1846 = vmatpush.bf16.msra.mxu0 %v1128
  %1847 = vmatpush.bf16.msra.mxu0 %v1124
  %1848 = vmatmul.bf16.gmra.mxu0 %v49
  %v1849 = vpop.f32.mrf.mxu0
  %v1850 = vadd.f32 %v1836, %v1849
  %v1851 = vpop.f32.mrf.mxu0
  %v1852 = vadd.f32 %v1838, %v1851
  %1853 = vdwg.mxu0
  %1854 = vmatpush.bf16.msra.mxu0 %v1184
  %1855 = vmatpush.bf16.msra.mxu0 %v1180
  %1856 = vmatpush.bf16.msra.mxu0 %v1176
  %1857 = vmatpush.bf16.msra.mxu0 %v1172
  %1858 = vmatpush.bf16.msra.mxu0 %v1168
  %1859 = vmatpush.bf16.msra.mxu0 %v1164
  %1860 = vmatpush.bf16.msra.mxu0 %v1160
  %1861 = vmatpush.bf16.msra.mxu0 %v1156
  %1862 = vmatmul.bf16.gmra.mxu0 %v50
  %v1863 = vpop.f32.mrf.mxu0
  %v1864 = vadd.f32 %v1850, %v1863
  %v1865 = vpop.f32.mrf.mxu0
  %v1866 = vadd.f32 %v1852, %v1865
  %1867 = vdwg.mxu0
  %1868 = vmatpush.bf16.msra.mxu0 %v1216
  %1869 = vmatpush.bf16.msra.mxu0 %v1212
  %1870 = vmatpush.bf16.msra.mxu0 %v1208
  %1871 = vmatpush.bf16.msra.mxu0 %v1204
  %1872 = vmatpush.bf16.msra.mxu0 %v1200
  %1873 = vmatpush.bf16.msra.mxu0 %v1196
  %1874 = vmatpush.bf16.msra.mxu0 %v1192
  %1875 = vmatpush.bf16.msra.mxu0 %v1188
  %1876 = vmatmul.bf16.gmra.mxu0 %v51
  %v1877 = vpop.f32.mrf.mxu0
  %v1878 = vadd.f32 %v1864, %v1877
  %v1879 = vpop.f32.mrf.mxu0
  %v1880 = vadd.f32 %v1866, %v1879
  %1881 = vdwg.mxu0
  %1882 = vmatpush.bf16.msra.mxu0 %v1248
  %1883 = vmatpush.bf16.msra.mxu0 %v1244
  %1884 = vmatpush.bf16.msra.mxu0 %v1240
  %1885 = vmatpush.bf16.msra.mxu0 %v1236
  %1886 = vmatpush.bf16.msra.mxu0 %v1232
  %1887 = vmatpush.bf16.msra.mxu0 %v1228
  %1888 = vmatpush.bf16.msra.mxu0 %v1224
  %1889 = vmatpush.bf16.msra.mxu0 %v1220
  %1890 = vmatmul.bf16.gmra.mxu0 %v52
  %v1891 = vpop.f32.mrf.mxu0
  %v1892 = vadd.f32 %v1878, %v1891
  %v1893 = vpop.f32.mrf.mxu0
  %v1894 = vadd.f32 %v1880, %v1893
  %1895 = vdwg.mxu0
  %1896 = vmatpush.bf16.msra.mxu0 %v1280
  %1897 = vmatpush.bf16.msra.mxu0 %v1276
  %1898 = vmatpush.bf16.msra.mxu0 %v1272
  %1899 = vmatpush.bf16.msra.mxu0 %v1268
  %1900 = vmatpush.bf16.msra.mxu0 %v1264
  %1901 = vmatpush.bf16.msra.mxu0 %v1260
  %1902 = vmatpush.bf16.msra.mxu0 %v1256
  %1903 = vmatpush.bf16.msra.mxu0 %v1252
  %1904 = vmatmul.bf16.gmra.mxu0 %v53
  %v1905 = vpop.f32.mrf.mxu0
  %v1906 = vadd.f32 %v1892, %v1905
  %v1907 = vpop.f32.mrf.mxu0
  %v1908 = vadd.f32 %v1894, %v1907
  %1909 = vdwg.mxu0
  %1910 = vmatpush.bf16.msra.mxu0 %v1312
  %1911 = vmatpush.bf16.msra.mxu0 %v1308
  %1912 = vmatpush.bf16.msra.mxu0 %v1304
  %1913 = vmatpush.bf16.msra.mxu0 %v1300
  %1914 = vmatpush.bf16.msra.mxu0 %v1296
  %1915 = vmatpush.bf16.msra.mxu0 %v1292
  %1916 = vmatpush.bf16.msra.mxu0 %v1288
  %1917 = vmatpush.bf16.msra.mxu0 %v1284
  %1918 = vmatmul.bf16.gmra.mxu0 %v54
  %v1919 = vpop.f32.mrf.mxu0
  %v1920 = vadd.f32 %v1906, %v1919
  %v1921 = vpop.f32.mrf.mxu0
  %v1922 = vadd.f32 %v1908, %v1921
  %1923 = vdwg.mxu0
  %1924 = vmatpush.bf16.msra.mxu0 %v1344
  %1925 = vmatpush.bf16.msra.mxu0 %v1340
  %1926 = vmatpush.bf16.msra.mxu0 %v1336
  %1927 = vmatpush.bf16.msra.mxu0 %v1332
  %1928 = vmatpush.bf16.msra.mxu0 %v1328
  %1929 = vmatpush.bf16.msra.mxu0 %v1324
  %1930 = vmatpush.bf16.msra.mxu0 %v1320
  %1931 = vmatpush.bf16.msra.mxu0 %v1316
  %1932 = vmatmul.bf16.gmra.mxu0 %v55
  %v1933 = vpop.f32.mrf.mxu0
  %v1934 = vadd.f32 %v1920, %v1933
  %v1935 = vpop.f32.mrf.mxu0
  %v1936 = vadd.f32 %v1922, %v1935
  %1937 = vdwg.mxu0
  %1938 = vmatpush.bf16.msra.mxu0 %v1121
  %1939 = vmatpush.bf16.msra.mxu0 %v1117
  %1940 = vmatpush.bf16.msra.mxu0 %v1113
  %1941 = vmatpush.bf16.msra.mxu0 %v1109
  %1942 = vmatpush.bf16.msra.mxu0 %v1105
  %1943 = vmatpush.bf16.msra.mxu0 %v1101
  %1944 = vmatpush.bf16.msra.mxu0 %v1097
  %1945 = vmatpush.bf16.msra.mxu0 %v1093
  %1946 = vmatmul.bf16.gmra.mxu0 %v48
  %v1947 = vpop.f32.mrf.mxu0
  %v1948 = vadd.f32 %v317, %v1947
  %v1949 = vpop.f32.mrf.mxu0
  %v1950 = vadd.f32 %v317, %v1949
  %1951 = vdwg.mxu0
  %1952 = vmatpush.bf16.msra.mxu0 %v1153
  %1953 = vmatpush.bf16.msra.mxu0 %v1149
  %1954 = vmatpush.bf16.msra.mxu0 %v1145
  %1955 = vmatpush.bf16.msra.mxu0 %v1141
  %1956 = vmatpush.bf16.msra.mxu0 %v1137
  %1957 = vmatpush.bf16.msra.mxu0 %v1133
  %1958 = vmatpush.bf16.msra.mxu0 %v1129
  %1959 = vmatpush.bf16.msra.mxu0 %v1125
  %1960 = vmatmul.bf16.gmra.mxu0 %v49
  %v1961 = vpop.f32.mrf.mxu0
  %v1962 = vadd.f32 %v1948, %v1961
  %v1963 = vpop.f32.mrf.mxu0
  %v1964 = vadd.f32 %v1950, %v1963
  %1965 = vdwg.mxu0
  %1966 = vmatpush.bf16.msra.mxu0 %v1185
  %1967 = vmatpush.bf16.msra.mxu0 %v1181
  %1968 = vmatpush.bf16.msra.mxu0 %v1177
  %1969 = vmatpush.bf16.msra.mxu0 %v1173
  %1970 = vmatpush.bf16.msra.mxu0 %v1169
  %1971 = vmatpush.bf16.msra.mxu0 %v1165
  %1972 = vmatpush.bf16.msra.mxu0 %v1161
  %1973 = vmatpush.bf16.msra.mxu0 %v1157
  %1974 = vmatmul.bf16.gmra.mxu0 %v50
  %v1975 = vpop.f32.mrf.mxu0
  %v1976 = vadd.f32 %v1962, %v1975
  %v1977 = vpop.f32.mrf.mxu0
  %v1978 = vadd.f32 %v1964, %v1977
  %1979 = vdwg.mxu0
  %1980 = vmatpush.bf16.msra.mxu0 %v1217
  %1981 = vmatpush.bf16.msra.mxu0 %v1213
  %1982 = vmatpush.bf16.msra.mxu0 %v1209
  %1983 = vmatpush.bf16.msra.mxu0 %v1205
  %1984 = vmatpush.bf16.msra.mxu0 %v1201
  %1985 = vmatpush.bf16.msra.mxu0 %v1197
  %1986 = vmatpush.bf16.msra.mxu0 %v1193
  %1987 = vmatpush.bf16.msra.mxu0 %v1189
  %1988 = vmatmul.bf16.gmra.mxu0 %v51
  %v1989 = vpop.f32.mrf.mxu0
  %v1990 = vadd.f32 %v1976, %v1989
  %v1991 = vpop.f32.mrf.mxu0
  %v1992 = vadd.f32 %v1978, %v1991
  %1993 = vdwg.mxu0
  %1994 = vmatpush.bf16.msra.mxu0 %v1249
  %1995 = vmatpush.bf16.msra.mxu0 %v1245
  %1996 = vmatpush.bf16.msra.mxu0 %v1241
  %1997 = vmatpush.bf16.msra.mxu0 %v1237
  %1998 = vmatpush.bf16.msra.mxu0 %v1233
  %1999 = vmatpush.bf16.msra.mxu0 %v1229
  %2000 = vmatpush.bf16.msra.mxu0 %v1225
  %2001 = vmatpush.bf16.msra.mxu0 %v1221
  %2002 = vmatmul.bf16.gmra.mxu0 %v52
  %v2003 = vpop.f32.mrf.mxu0
  %v2004 = vadd.f32 %v1990, %v2003
  %v2005 = vpop.f32.mrf.mxu0
  %v2006 = vadd.f32 %v1992, %v2005
  %2007 = vdwg.mxu0
  %2008 = vmatpush.bf16.msra.mxu0 %v1281
  %2009 = vmatpush.bf16.msra.mxu0 %v1277
  %2010 = vmatpush.bf16.msra.mxu0 %v1273
  %2011 = vmatpush.bf16.msra.mxu0 %v1269
  %2012 = vmatpush.bf16.msra.mxu0 %v1265
  %2013 = vmatpush.bf16.msra.mxu0 %v1261
  %2014 = vmatpush.bf16.msra.mxu0 %v1257
  %2015 = vmatpush.bf16.msra.mxu0 %v1253
  %2016 = vmatmul.bf16.gmra.mxu0 %v53
  %v2017 = vpop.f32.mrf.mxu0
  %v2018 = vadd.f32 %v2004, %v2017
  %v2019 = vpop.f32.mrf.mxu0
  %v2020 = vadd.f32 %v2006, %v2019
  %2021 = vdwg.mxu0
  %2022 = vmatpush.bf16.msra.mxu0 %v1313
  %2023 = vmatpush.bf16.msra.mxu0 %v1309
  %2024 = vmatpush.bf16.msra.mxu0 %v1305
  %2025 = vmatpush.bf16.msra.mxu0 %v1301
  %2026 = vmatpush.bf16.msra.mxu0 %v1297
  %2027 = vmatpush.bf16.msra.mxu0 %v1293
  %2028 = vmatpush.bf16.msra.mxu0 %v1289
  %2029 = vmatpush.bf16.msra.mxu0 %v1285
  %2030 = vmatmul.bf16.gmra.mxu0 %v54
  %v2031 = vpop.f32.mrf.mxu0
  %v2032 = vadd.f32 %v2018, %v2031
  %v2033 = vpop.f32.mrf.mxu0
  %v2034 = vadd.f32 %v2020, %v2033
  %2035 = vdwg.mxu0
  %2036 = vmatpush.bf16.msra.mxu0 %v1345
  %2037 = vmatpush.bf16.msra.mxu0 %v1341
  %2038 = vmatpush.bf16.msra.mxu0 %v1337
  %2039 = vmatpush.bf16.msra.mxu0 %v1333
  %2040 = vmatpush.bf16.msra.mxu0 %v1329
  %2041 = vmatpush.bf16.msra.mxu0 %v1325
  %2042 = vmatpush.bf16.msra.mxu0 %v1321
  %2043 = vmatpush.bf16.msra.mxu0 %v1317
  %2044 = vmatmul.bf16.gmra.mxu0 %v55
  %v2045 = vpop.f32.mrf.mxu0
  %v2046 = vadd.f32 %v2032, %v2045
  %v2047 = vpop.f32.mrf.mxu0
  %v2048 = vadd.f32 %v2034, %v2047
  %2049 = vdwg.mxu0
  %v2050 = vmax.f32 %v1710, 0.0
  %v2051 = vmax.f32 %v1822, 0.0
  %v2052 = vmax.f32 %v1934, 0.0
  %v2053 = vmax.f32 %v2046, 0.0
  %v2054 = vmax.f32 %v1712, 0.0
  %v2055 = vmax.f32 %v1824, 0.0
  %v2056 = vmax.f32 %v1936, 0.0
  %v2057 = vmax.f32 %v2048, 0.0
  %v2058 = vpack.c.bf16 %v2054, %v2050
  %v2059 = vpack.c.bf16 %v2055, %v2051
  %v2060 = vpack.c.bf16 %v2056, %v2052
  %v2061 = vpack.c.bf16 %v2057, %v2053
  %v2062 = vld [vmem:[%s3] sm:$0xff]
  %v2063 = vld [vmem:[%s3 + $0x8] sm:$0xff]
  %v2064 = vld [vmem:[%s3 + $0x10] sm:$0xff]
  %v2065 = vld [vmem:[%s3 + $0x18] sm:$0xff]
  %v2066 = vld [vmem:[%s3 + $0x20] sm:$0xff]
  %v2067 = vld [vmem:[%s3 + $0x28] sm:$0xff]
  %v2068 = vld [vmem:[%s3 + $0x30] sm:$0xff]
  %v2069 = vld [vmem:[%s3 + $0x38] sm:$0xff]
  %v2070 = vld [vmem:[%s3 + $0x40] sm:$0xff]
  %v2071 = vld [vmem:[%s3 + $0x48] sm:$0xff]
  %v2072 = vld [vmem:[%s3 + $0x50] sm:$0xff]
  %v2073 = vld [vmem:[%s3 + $0x58] sm:$0xff]
  %v2074 = vld [vmem:[%s3 + $0x60] sm:$0xff]
  %v2075 = vld [vmem:[%s3 + $0x68] sm:$0xff]
  %v2076 = vld [vmem:[%s3 + $0x70] sm:$0xff]
  %v2077 = vld [vmem:[%s3 + $0x78] sm:$0xff]
  %v2078 = vld [vmem:[%s3 + $0x80] sm:$0xff]
  %v2079 = vld [vmem:[%s3 + $0x88] sm:$0xff]
  %v2080 = vld [vmem:[%s3 + $0x90] sm:$0xff]
  %v2081 = vld [vmem:[%s3 + $0x98] sm:$0xff]
  %v2082 = vld [vmem:[%s3 + $0xa0] sm:$0xff]
  %v2083 = vld [vmem:[%s3 + $0xa8] sm:$0xff]
  %v2084 = vld [vmem:[%s3 + $0xb0] sm:$0xff]
  %v2085 = vld [vmem:[%s3 + $0xb8] sm:$0xff]
  %v2086 = vld [vmem:[%s3 + $0xc0] sm:$0xff]
  %v2087 = vld [vmem:[%s3 + $0xc8] sm:$0xff]
  %v2088 = vld [vmem:[%s3 + $0xd0] sm:$0xff]
  %v2089 = vld [vmem:[%s3 + $0xd8] sm:$0xff]
  %v2090 = vld [vmem:[%s3 + $0xe0] sm:$0xff]
  %v2091 = vld [vmem:[%s3 + $0xe8] sm:$0xff]
  %v2092 = vld [vmem:[%s3 + $0xf0] sm:$0xff]
  %v2093 = vld [vmem:[%s3 + $0xf8] sm:$0xff]
  %v2094 = vld [vmem:[%s3 + $0x100] sm:$0xff]
  %v2095 = vld [vmem:[%s3 + $0x108] sm:$0xff]
  %v2096 = vld [vmem:[%s3 + $0x110] sm:$0xff]
  %v2097 = vld [vmem:[%s3 + $0x118] sm:$0xff]
  %v2098 = vld [vmem:[%s3 + $0x120] sm:$0xff]
  %v2099 = vld [vmem:[%s3 + $0x128] sm:$0xff]
  %v2100 = vld [vmem:[%s3 + $0x130] sm:$0xff]
  %v2101 = vld [vmem:[%s3 + $0x138] sm:$0xff]
  %v2102 = vld [vmem:[%s3 + $0x140] sm:$0xff]
  %v2103 = vld [vmem:[%s3 + $0x148] sm:$0xff]
  %v2104 = vld [vmem:[%s3 + $0x150] sm:$0xff]
  %v2105 = vld [vmem:[%s3 + $0x158] sm:$0xff]
  %v2106 = vld [vmem:[%s3 + $0x160] sm:$0xff]
  %v2107 = vld [vmem:[%s3 + $0x168] sm:$0xff]
  %v2108 = vld [vmem:[%s3 + $0x170] sm:$0xff]
  %v2109 = vld [vmem:[%s3 + $0x178] sm:$0xff]
  %v2110 = vld [vmem:[%s3 + $0x180] sm:$0xff]
  %v2111 = vld [vmem:[%s3 + $0x188] sm:$0xff]
  %v2112 = vld [vmem:[%s3 + $0x190] sm:$0xff]
  %v2113 = vld [vmem:[%s3 + $0x198] sm:$0xff]
  %v2114 = vld [vmem:[%s3 + $0x1a0] sm:$0xff]
  %v2115 = vld [vmem:[%s3 + $0x1a8] sm:$0xff]
  %v2116 = vld [vmem:[%s3 + $0x1b0] sm:$0xff]
  %v2117 = vld [vmem:[%s3 + $0x1b8] sm:$0xff]
  %v2118 = vld [vmem:[%s3 + $0x1c0] sm:$0xff]
  %v2119 = vld [vmem:[%s3 + $0x1c8] sm:$0xff]
  %v2120 = vld [vmem:[%s3 + $0x1d0] sm:$0xff]
  %v2121 = vld [vmem:[%s3 + $0x1d8] sm:$0xff]
  %v2122 = vld [vmem:[%s3 + $0x1e0] sm:$0xff]
  %v2123 = vld [vmem:[%s3 + $0x1e8] sm:$0xff]
  %v2124 = vld [vmem:[%s3 + $0x1f0] sm:$0xff]
  %v2125 = vld [vmem:[%s3 + $0x1f8] sm:$0xff]
  %v2126 = vld [vmem:[%s4] sm:$0x3]
  %v2128 = vperm.slane %v2126, 0
  %v2129 = vperm.slane %v2126, 1
  %v2196 = vunpack.c.l.b16 %v2062
  %v2197 = vunpack.c.h.b16 %v2062
  %v2198 = vunpack.c.l.b16 %v2063
  %v2199 = vunpack.c.h.b16 %v2063
  %v2200 = vunpack.c.l.b16 %v2064
  %v2201 = vunpack.c.h.b16 %v2064
  %v2202 = vunpack.c.l.b16 %v2065
  %v2203 = vunpack.c.h.b16 %v2065
  %v2204 = vunpack.c.l.b16 %v2066
  %v2205 = vunpack.c.h.b16 %v2066
  %v2206 = vunpack.c.l.b16 %v2067
  %v2207 = vunpack.c.h.b16 %v2067
  %v2208 = vunpack.c.l.b16 %v2068
  %v2209 = vunpack.c.h.b16 %v2068
  %v2210 = vunpack.c.l.b16 %v2069
  %v2211 = vunpack.c.h.b16 %v2069
  %v2212 = vunpack.c.l.b16 %v2070
  %v2213 = vunpack.c.h.b16 %v2070
  %v2214 = vunpack.c.l.b16 %v2071
  %v2215 = vunpack.c.h.b16 %v2071
  %v2216 = vunpack.c.l.b16 %v2072
  %v2217 = vunpack.c.h.b16 %v2072
  %v2218 = vunpack.c.l.b16 %v2073
  %v2219 = vunpack.c.h.b16 %v2073
  %v2220 = vunpack.c.l.b16 %v2074
  %v2221 = vunpack.c.h.b16 %v2074
  %v2222 = vunpack.c.l.b16 %v2075
  %v2223 = vunpack.c.h.b16 %v2075
  %v2224 = vunpack.c.l.b16 %v2076
  %v2225 = vunpack.c.h.b16 %v2076
  %v2226 = vunpack.c.l.b16 %v2077
  %v2227 = vunpack.c.h.b16 %v2077
  %v2228 = vunpack.c.l.b16 %v2078
  %v2229 = vunpack.c.h.b16 %v2078
  %v2230 = vunpack.c.l.b16 %v2079
  %v2231 = vunpack.c.h.b16 %v2079
  %v2232 = vunpack.c.l.b16 %v2080
  %v2233 = vunpack.c.h.b16 %v2080
  %v2234 = vunpack.c.l.b16 %v2081
  %v2235 = vunpack.c.h.b16 %v2081
  %v2236 = vunpack.c.l.b16 %v2082
  %v2237 = vunpack.c.h.b16 %v2082
  %v2238 = vunpack.c.l.b16 %v2083
  %v2239 = vunpack.c.h.b16 %v2083
  %v2240 = vunpack.c.l.b16 %v2084
  %v2241 = vunpack.c.h.b16 %v2084
  %v2242 = vunpack.c.l.b16 %v2085
  %v2243 = vunpack.c.h.b16 %v2085
  %v2244 = vunpack.c.l.b16 %v2086
  %v2245 = vunpack.c.h.b16 %v2086
  %v2246 = vunpack.c.l.b16 %v2087
  %v2247 = vunpack.c.h.b16 %v2087
  %v2248 = vunpack.c.l.b16 %v2088
  %v2249 = vunpack.c.h.b16 %v2088
  %v2250 = vunpack.c.l.b16 %v2089
  %v2251 = vunpack.c.h.b16 %v2089
  %v2252 = vunpack.c.l.b16 %v2090
  %v2253 = vunpack.c.h.b16 %v2090
  %v2254 = vunpack.c.l.b16 %v2091
  %v2255 = vunpack.c.h.b16 %v2091
  %v2256 = vunpack.c.l.b16 %v2092
  %v2257 = vunpack.c.h.b16 %v2092
  %v2258 = vunpack.c.l.b16 %v2093
  %v2259 = vunpack.c.h.b16 %v2093
  %v2260 = vunpack.c.l.b16 %v2094
  %v2261 = vunpack.c.h.b16 %v2094
  %v2262 = vunpack.c.l.b16 %v2095
  %v2263 = vunpack.c.h.b16 %v2095
  %v2264 = vunpack.c.l.b16 %v2096
  %v2265 = vunpack.c.h.b16 %v2096
  %v2266 = vunpack.c.l.b16 %v2097
  %v2267 = vunpack.c.h.b16 %v2097
  %v2268 = vunpack.c.l.b16 %v2098
  %v2269 = vunpack.c.h.b16 %v2098
  %v2270 = vunpack.c.l.b16 %v2099
  %v2271 = vunpack.c.h.b16 %v2099
  %v2272 = vunpack.c.l.b16 %v2100
  %v2273 = vunpack.c.h.b16 %v2100
  %v2274 = vunpack.c.l.b16 %v2101
  %v2275 = vunpack.c.h.b16 %v2101
  %v2276 = vunpack.c.l.b16 %v2102
  %v2277 = vunpack.c.h.b16 %v2102
  %v2278 = vunpack.c.l.b16 %v2103
  %v2279 = vunpack.c.h.b16 %v2103
  %v2280 = vunpack.c.l.b16 %v2104
  %v2281 = vunpack.c.h.b16 %v2104
  %v2282 = vunpack.c.l.b16 %v2105
  %v2283 = vunpack.c.h.b16 %v2105
  %v2284 = vunpack.c.l.b16 %v2106
  %v2285 = vunpack.c.h.b16 %v2106
  %v2286 = vunpack.c.l.b16 %v2107
  %v2287 = vunpack.c.h.b16 %v2107
  %v2288 = vunpack.c.l.b16 %v2108
  %v2289 = vunpack.c.h.b16 %v2108
  %v2290 = vunpack.c.l.b16 %v2109
  %v2291 = vunpack.c.h.b16 %v2109
  %v2292 = vunpack.c.l.b16 %v2110
  %v2293 = vunpack.c.h.b16 %v2110
  %v2294 = vunpack.c.l.b16 %v2111
  %v2295 = vunpack.c.h.b16 %v2111
  %v2296 = vunpack.c.l.b16 %v2112
  %v2297 = vunpack.c.h.b16 %v2112
  %v2298 = vunpack.c.l.b16 %v2113
  %v2299 = vunpack.c.h.b16 %v2113
  %v2300 = vunpack.c.l.b16 %v2114
  %v2301 = vunpack.c.h.b16 %v2114
  %v2302 = vunpack.c.l.b16 %v2115
  %v2303 = vunpack.c.h.b16 %v2115
  %v2304 = vunpack.c.l.b16 %v2116
  %v2305 = vunpack.c.h.b16 %v2116
  %v2306 = vunpack.c.l.b16 %v2117
  %v2307 = vunpack.c.h.b16 %v2117
  %v2308 = vunpack.c.l.b16 %v2118
  %v2309 = vunpack.c.h.b16 %v2118
  %v2310 = vunpack.c.l.b16 %v2119
  %v2311 = vunpack.c.h.b16 %v2119
  %v2312 = vunpack.c.l.b16 %v2120
  %v2313 = vunpack.c.h.b16 %v2120
  %v2314 = vunpack.c.l.b16 %v2121
  %v2315 = vunpack.c.h.b16 %v2121
  %v2316 = vunpack.c.l.b16 %v2122
  %v2317 = vunpack.c.h.b16 %v2122
  %v2318 = vunpack.c.l.b16 %v2123
  %v2319 = vunpack.c.h.b16 %v2123
  %v2320 = vunpack.c.l.b16 %v2124
  %v2321 = vunpack.c.h.b16 %v2124
  %v2322 = vunpack.c.l.b16 %v2125
  %v2323 = vunpack.c.h.b16 %v2125
  %v2324 = vpack.c.b16 %v2198, %v2196
  %v2325 = vpack.c.b16 %v2199, %v2197
  %v2326 = vpack.c.b16 %v2202, %v2200
  %v2327 = vpack.c.b16 %v2203, %v2201
  %v2328 = vpack.c.b16 %v2206, %v2204
  %v2329 = vpack.c.b16 %v2207, %v2205
  %v2330 = vpack.c.b16 %v2210, %v2208
  %v2331 = vpack.c.b16 %v2211, %v2209
  %v2332 = vpack.c.b16 %v2214, %v2212
  %v2333 = vpack.c.b16 %v2215, %v2213
  %v2334 = vpack.c.b16 %v2218, %v2216
  %v2335 = vpack.c.b16 %v2219, %v2217
  %v2336 = vpack.c.b16 %v2222, %v2220
  %v2337 = vpack.c.b16 %v2223, %v2221
  %v2338 = vpack.c.b16 %v2226, %v2224
  %v2339 = vpack.c.b16 %v2227, %v2225
  %v2340 = vpack.c.b16 %v2230, %v2228
  %v2341 = vpack.c.b16 %v2231, %v2229
  %v2342 = vpack.c.b16 %v2234, %v2232
  %v2343 = vpack.c.b16 %v2235, %v2233
  %v2344 = vpack.c.b16 %v2238, %v2236
  %v2345 = vpack.c.b16 %v2239, %v2237
  %v2346 = vpack.c.b16 %v2242, %v2240
  %v2347 = vpack.c.b16 %v2243, %v2241
  %v2348 = vpack.c.b16 %v2246, %v2244
  %v2349 = vpack.c.b16 %v2247, %v2245
  %v2350 = vpack.c.b16 %v2250, %v2248
  %v2351 = vpack.c.b16 %v2251, %v2249
  %v2352 = vpack.c.b16 %v2254, %v2252
  %v2353 = vpack.c.b16 %v2255, %v2253
  %v2354 = vpack.c.b16 %v2258, %v2256
  %v2355 = vpack.c.b16 %v2259, %v2257
  %v2356 = vpack.c.b16 %v2262, %v2260
  %v2357 = vpack.c.b16 %v2263, %v2261
  %v2358 = vpack.c.b16 %v2266, %v2264
  %v2359 = vpack.c.b16 %v2267, %v2265
  %v2360 = vpack.c.b16 %v2270, %v2268
  %v2361 = vpack.c.b16 %v2271, %v2269
  %v2362 = vpack.c.b16 %v2274, %v2272
  %v2363 = vpack.c.b16 %v2275, %v2273
  %v2364 = vpack.c.b16 %v2278, %v2276
  %v2365 = vpack.c.b16 %v2279, %v2277
  %v2366 = vpack.c.b16 %v2282, %v2280
  %v2367 = vpack.c.b16 %v2283, %v2281
  %v2368 = vpack.c.b16 %v2286, %v2284
  %v2369 = vpack.c.b16 %v2287, %v2285
  %v2370 = vpack.c.b16 %v2290, %v2288
  %v2371 = vpack.c.b16 %v2291, %v2289
  %v2372 = vpack.c.b16 %v2294, %v2292
  %v2373 = vpack.c.b16 %v2295, %v2293
  %v2374 = vpack.c.b16 %v2298, %v2296
  %v2375 = vpack.c.b16 %v2299, %v2297
  %v2376 = vpack.c.b16 %v2302, %v2300
  %v2377 = vpack.c.b16 %v2303, %v2301
  %v2378 = vpack.c.b16 %v2306, %v2304
  %v2379 = vpack.c.b16 %v2307, %v2305
  %v2380 = vpack.c.b16 %v2310, %v2308
  %v2381 = vpack.c.b16 %v2311, %v2309
  %v2382 = vpack.c.b16 %v2314, %v2312
  %v2383 = vpack.c.b16 %v2315, %v2313
  %v2384 = vpack.c.b16 %v2318, %v2316
  %v2385 = vpack.c.b16 %v2319, %v2317
  %v2386 = vpack.c.b16 %v2322, %v2320
  %v2387 = vpack.c.b16 %v2323, %v2321
  %2452 = vmatpush.bf16.msra.mxu0 %v2338
  %2453 = vmatpush.bf16.msra.mxu0 %v2336
  %2454 = vmatpush.bf16.msra.mxu0 %v2334
  %2455 = vmatpush.bf16.msra.mxu0 %v2332
  %2456 = vmatpush.bf16.msra.mxu0 %v2330
  %2457 = vmatpush.bf16.msra.mxu0 %v2328
  %2458 = vmatpush.bf16.msra.mxu0 %v2326
  %2459 = vmatpush.bf16.msra.mxu0 %v2324
  %2460 = vmatmul.bf16.gmra.mxu0 %v2058
  %v2461 = vpop.f32.mrf.mxu0
  %v2462 = vadd.f32 %v2128, %v2461
  %v2463 = vpop.f32.mrf.mxu0
  %v2464 = vadd.f32 %v2128, %v2463
  %2465 = vdwg.mxu0
  %2466 = vmatpush.bf16.msra.mxu0 %v2354
  %2467 = vmatpush.bf16.msra.mxu0 %v2352
  %2468 = vmatpush.bf16.msra.mxu0 %v2350
  %2469 = vmatpush.bf16.msra.mxu0 %v2348
  %2470 = vmatpush.bf16.msra.mxu0 %v2346
  %2471 = vmatpush.bf16.msra.mxu0 %v2344
  %2472 = vmatpush.bf16.msra.mxu0 %v2342
  %2473 = vmatpush.bf16.msra.mxu0 %v2340
  %2474 = vmatmul.bf16.gmra.mxu0 %v2059
  %v2475 = vpop.f32.mrf.mxu0
  %v2476 = vadd.f32 %v2462, %v2475
  %v2477 = vpop.f32.mrf.mxu0
  %v2478 = vadd.f32 %v2464, %v2477
  %2479 = vdwg.mxu0
  %2480 = vmatpush.bf16.msra.mxu0 %v2370
  %2481 = vmatpush.bf16.msra.mxu0 %v2368
  %2482 = vmatpush.bf16.msra.mxu0 %v2366
  %2483 = vmatpush.bf16.msra.mxu0 %v2364
  %2484 = vmatpush.bf16.msra.mxu0 %v2362
  %2485 = vmatpush.bf16.msra.mxu0 %v2360
  %2486 = vmatpush.bf16.msra.mxu0 %v2358
  %2487 = vmatpush.bf16.msra.mxu0 %v2356
  %2488 = vmatmul.bf16.gmra.mxu0 %v2060
  %v2489 = vpop.f32.mrf.mxu0
  %v2490 = vadd.f32 %v2476, %v2489
  %v2491 = vpop.f32.mrf.mxu0
  %v2492 = vadd.f32 %v2478, %v2491
  %2493 = vdwg.mxu0
  %2494 = vmatpush.bf16.msra.mxu0 %v2386
  %2495 = vmatpush.bf16.msra.mxu0 %v2384
  %2496 = vmatpush.bf16.msra.mxu0 %v2382
  %2497 = vmatpush.bf16.msra.mxu0 %v2380
  %2498 = vmatpush.bf16.msra.mxu0 %v2378
  %2499 = vmatpush.bf16.msra.mxu0 %v2376
  %2500 = vmatpush.bf16.msra.mxu0 %v2374
  %2501 = vmatpush.bf16.msra.mxu0 %v2372
  %2502 = vmatmul.bf16.gmra.mxu0 %v2061
  %v2503 = vpop.f32.mrf.mxu0
  %v2504 = vadd.f32 %v2490, %v2503
  %v2505 = vpop.f32.mrf.mxu0
  %v2506 = vadd.f32 %v2492, %v2505
  %2507 = vdwg.mxu0
  %2508 = vmatpush.bf16.msra.mxu0 %v2339
  %2509 = vmatpush.bf16.msra.mxu0 %v2337
  %2510 = vmatpush.bf16.msra.mxu0 %v2335
  %2511 = vmatpush.bf16.msra.mxu0 %v2333
  %2512 = vmatpush.bf16.msra.mxu0 %v2331
  %2513 = vmatpush.bf16.msra.mxu0 %v2329
  %2514 = vmatpush.bf16.msra.mxu0 %v2327
  %2515 = vmatpush.bf16.msra.mxu0 %v2325
  %2516 = vmatmul.bf16.gmra.mxu0 %v2058
  %v2517 = vpop.f32.mrf.mxu0
  %v2518 = vadd.f32 %v2129, %v2517
  %v2519 = vpop.f32.mrf.mxu0
  %v2520 = vadd.f32 %v2129, %v2519
  %2521 = vdwg.mxu0
  %2522 = vmatpush.bf16.msra.mxu0 %v2355
  %2523 = vmatpush.bf16.msra.mxu0 %v2353
  %2524 = vmatpush.bf16.msra.mxu0 %v2351
  %2525 = vmatpush.bf16.msra.mxu0 %v2349
  %2526 = vmatpush.bf16.msra.mxu0 %v2347
  %2527 = vmatpush.bf16.msra.mxu0 %v2345
  %2528 = vmatpush.bf16.msra.mxu0 %v2343
  %2529 = vmatpush.bf16.msra.mxu0 %v2341
  %2530 = vmatmul.bf16.gmra.mxu0 %v2059
  %v2531 = vpop.f32.mrf.mxu0
  %v2532 = vadd.f32 %v2518, %v2531
  %v2533 = vpop.f32.mrf.mxu0
  %v2534 = vadd.f32 %v2520, %v2533
  %2535 = vdwg.mxu0
  %2536 = vmatpush.bf16.msra.mxu0 %v2371
  %2537 = vmatpush.bf16.msra.mxu0 %v2369
  %2538 = vmatpush.bf16.msra.mxu0 %v2367
  %2539 = vmatpush.bf16.msra.mxu0 %v2365
  %2540 = vmatpush.bf16.msra.mxu0 %v2363
  %2541 = vmatpush.bf16.msra.mxu0 %v2361
  %2542 = vmatpush.bf16.msra.mxu0 %v2359
  %2543 = vmatpush.bf16.msra.mxu0 %v2357
  %2544 = vmatmul.bf16.gmra.mxu0 %v2060
  %v2545 = vpop.f32.mrf.mxu0
  %v2546 = vadd.f32 %v2532, %v2545
  %v2547 = vpop.f32.mrf.mxu0
  %v2548 = vadd.f32 %v2534, %v2547
  %2549 = vdwg.mxu0
  %2550 = vmatpush.bf16.msra.mxu0 %v2387
  %2551 = vmatpush.bf16.msra.mxu0 %v2385
  %2552 = vmatpush.bf16.msra.mxu0 %v2383
  %2553 = vmatpush.bf16.msra.mxu0 %v2381
  %2554 = vmatpush.bf16.msra.mxu0 %v2379
  %2555 = vmatpush.bf16.msra.mxu0 %v2377
  %2556 = vmatpush.bf16.msra.mxu0 %v2375
  %2557 = vmatpush.bf16.msra.mxu0 %v2373
  %2558 = vmatmul.bf16.gmra.mxu0 %v2061
  %v2559 = vpop.f32.mrf.mxu0
  %v2560 = vadd.f32 %v2546, %v2559
  %v2561 = vpop.f32.mrf.mxu0
  %v2562 = vadd.f32 %v2548, %v2561
  %2563 = vdwg.mxu0
  %v2564 = vmax.f32 %v2504, 0.0
  %v2565 = vmax.f32 %v2560, 0.0
  %v2566 = vmax.f32 %v2506, 0.0
  %v2567 = vmax.f32 %v2562, 0.0
  %v2568 = vpack.c.bf16 %v2566, %v2564
  %v2569 = vpack.c.bf16 %v2567, %v2565
  %v2570 = vld [vmem:[%s5] sm:$0xf]
  %v2571 = vld [vmem:[%s5 + $0x4] sm:$0xf]
  %v2572 = vld [vmem:[%s5 + $0x8] sm:$0xf]
  %v2573 = vld [vmem:[%s5 + $0xc] sm:$0xf]
  %v2574 = vld [vmem:[%s5 + $0x10] sm:$0xf]
  %v2575 = vld [vmem:[%s5 + $0x14] sm:$0xf]
  %v2576 = vld [vmem:[%s5 + $0x18] sm:$0xf]
  %v2577 = vld [vmem:[%s5 + $0x1c] sm:$0xf]
  %v2578 = vld [vmem:[%s5 + $0x20] sm:$0xf]
  %v2579 = vld [vmem:[%s5 + $0x24] sm:$0xf]
  %v2580 = vld [vmem:[%s5 + $0x28] sm:$0xf]
  %v2581 = vld [vmem:[%s5 + $0x2c] sm:$0xf]
  %v2582 = vld [vmem:[%s5 + $0x30] sm:$0xf]
  %v2583 = vld [vmem:[%s5 + $0x34] sm:$0xf]
  %v2584 = vld [vmem:[%s5 + $0x38] sm:$0xf]
  %v2585 = vld [vmem:[%s5 + $0x3c] sm:$0xf]
  %v2586 = vld [vmem:[%s5 + $0x40] sm:$0xf]
  %v2587 = vld [vmem:[%s5 + $0x44] sm:$0xf]
  %v2588 = vld [vmem:[%s5 + $0x48] sm:$0xf]
  %v2589 = vld [vmem:[%s5 + $0x4c] sm:$0xf]
  %v2590 = vld [vmem:[%s5 + $0x50] sm:$0xf]
  %v2591 = vld [vmem:[%s5 + $0x54] sm:$0xf]
  %v2592 = vld [vmem:[%s5 + $0x58] sm:$0xf]
  %v2593 = vld [vmem:[%s5 + $0x5c] sm:$0xf]
  %v2594 = vld [vmem:[%s5 + $0x60] sm:$0xf]
  %v2595 = vld [vmem:[%s5 + $0x64] sm:$0xf]
  %v2596 = vld [vmem:[%s5 + $0x68] sm:$0xf]
  %v2597 = vld [vmem:[%s5 + $0x6c] sm:$0xf]
  %v2598 = vld [vmem:[%s5 + $0x70] sm:$0xf]
  %v2599 = vld [vmem:[%s5 + $0x74] sm:$0xf]
  %v2600 = vld [vmem:[%s5 + $0x78] sm:$0xf]
  %v2601 = vld [vmem:[%s5 + $0x7c] sm:$0xf]
  %v2602 = vld [vmem:[%s6] sm:$0x1]
  %v2604 = vperm.slane %v2602, 0
  %v2638 = vunpack.c.l.b16 %v2570
  %v2639 = vunpack.c.l.b16 %v2571
  %v2640 = vunpack.c.l.b16 %v2572
  %v2641 = vunpack.c.l.b16 %v2573
  %v2642 = vunpack.c.l.b16 %v2574
  %v2643 = vunpack.c.l.b16 %v2575
  %v2644 = vunpack.c.l.b16 %v2576
  %v2645 = vunpack.c.l.b16 %v2577
  %v2646 = vunpack.c.l.b16 %v2578
  %v2647 = vunpack.c.l.b16 %v2579
  %v2648 = vunpack.c.l.b16 %v2580
  %v2649 = vunpack.c.l.b16 %v2581
  %v2650 = vunpack.c.l.b16 %v2582
  %v2651 = vunpack.c.l.b16 %v2583
  %v2652 = vunpack.c.l.b16 %v2584
  %v2653 = vunpack.c.l.b16 %v2585
  %v2654 = vunpack.c.l.b16 %v2586
  %v2655 = vunpack.c.l.b16 %v2587
  %v2656 = vunpack.c.l.b16 %v2588
  %v2657 = vunpack.c.l.b16 %v2589
  %v2658 = vunpack.c.l.b16 %v2590
  %v2659 = vunpack.c.l.b16 %v2591
  %v2660 = vunpack.c.l.b16 %v2592
  %v2661 = vunpack.c.l.b16 %v2593
  %v2662 = vunpack.c.l.b16 %v2594
  %v2663 = vunpack.c.l.b16 %v2595
  %v2664 = vunpack.c.l.b16 %v2596
  %v2665 = vunpack.c.l.b16 %v2597
  %v2666 = vunpack.c.l.b16 %v2598
  %v2667 = vunpack.c.l.b16 %v2599
  %v2668 = vunpack.c.l.b16 %v2600
  %v2669 = vunpack.c.l.b16 %v2601
  %v2670 = vpack.c.b16 %v2639, %v2638
  %v2671 = vpack.c.b16 %v2641, %v2640
  %v2672 = vpack.c.b16 %v2643, %v2642
  %v2673 = vpack.c.b16 %v2645, %v2644
  %v2674 = vpack.c.b16 %v2647, %v2646
  %v2675 = vpack.c.b16 %v2649, %v2648
  %v2676 = vpack.c.b16 %v2651, %v2650
  %v2677 = vpack.c.b16 %v2653, %v2652
  %v2678 = vpack.c.b16 %v2655, %v2654
  %v2679 = vpack.c.b16 %v2657, %v2656
  %v2680 = vpack.c.b16 %v2659, %v2658
  %v2681 = vpack.c.b16 %v2661, %v2660
  %v2682 = vpack.c.b16 %v2663, %v2662
  %v2683 = vpack.c.b16 %v2665, %v2664
  %v2684 = vpack.c.b16 %v2667, %v2666
  %v2685 = vpack.c.b16 %v2669, %v2668
  %2702 = vmatpush.bf16.msra.mxu0 %v2677
  %2703 = vmatpush.bf16.msra.mxu0 %v2676
  %2704 = vmatpush.bf16.msra.mxu0 %v2675
  %2705 = vmatpush.bf16.msra.mxu0 %v2674
  %2706 = vmatpush.bf16.msra.mxu0 %v2673
  %2707 = vmatpush.bf16.msra.mxu0 %v2672
  %2708 = vmatpush.bf16.msra.mxu0 %v2671
  %2709 = vmatpush.bf16.msra.mxu0 %v2670
  %2710 = vmatmul.bf16.gmra.mxu0 %v2568
  %v2711 = vpop.f32.mrf.mxu0
  %v2712 = vadd.f32 %v2604, %v2711
  %v2713 = vpop.f32.mrf.mxu0
  %v2714 = vadd.f32 %v2604, %v2713
  %2715 = vdwg.mxu0
  %2716 = vmatpush.bf16.msra.mxu0 %v2685
  %2717 = vmatpush.bf16.msra.mxu0 %v2684
  %2718 = vmatpush.bf16.msra.mxu0 %v2683
  %2719 = vmatpush.bf16.msra.mxu0 %v2682
  %2720 = vmatpush.bf16.msra.mxu0 %v2681
  %2721 = vmatpush.bf16.msra.mxu0 %v2680
  %2722 = vmatpush.bf16.msra.mxu0 %v2679
  %2723 = vmatpush.bf16.msra.mxu0 %v2678
  %2724 = vmatmul.bf16.gmra.mxu0 %v2569
  %v2725 = vpop.f32.mrf.mxu0
  %v2726 = vadd.f32 %v2712, %v2725
  %v2727 = vpop.f32.mrf.mxu0
  %v2728 = vadd.f32 %v2714, %v2727
  %2729 = vdwg.mxu0
  %v2730 = vmax.f32 %v2726, 0.0
  %v2731 = vmax.f32 %v2728, 0.0
  %v2732 = vpack.c.bf16 %v2731, %v2730
  %v2733 = vld [vmem:[%s7] sm:$0xf]
  %v2734 = vld [vmem:[%s7 + $0x4] sm:$0xf]
  %v2735 = vld [vmem:[%s7 + $0x8] sm:$0xf]
  %v2736 = vld [vmem:[%s7 + $0xc] sm:$0xf]
  %v2737 = vld [vmem:[%s7 + $0x10] sm:$0xf]
  %v2738 = vld [vmem:[%s7 + $0x14] sm:$0xf]
  %v2739 = vld [vmem:[%s7 + $0x18] sm:$0xf]
  %v2740 = vld [vmem:[%s7 + $0x1c] sm:$0xf]
  %v2741 = vld [vmem:[%s7 + $0x20] sm:$0xf]
  %v2742 = vld [vmem:[%s7 + $0x24] sm:$0xf]
  %v2743 = vld [vmem:[%s7 + $0x28] sm:$0xf]
  %v2744 = vld [vmem:[%s7 + $0x2c] sm:$0xf]
  %v2745 = vld [vmem:[%s7 + $0x30] sm:$0xf]
  %v2746 = vld [vmem:[%s7 + $0x34] sm:$0xf]
  %v2747 = vld [vmem:[%s7 + $0x38] sm:$0xf]
  %v2748 = vld [vmem:[%s7 + $0x3c] sm:$0xf]
  %v2749 = vld [vmem:[%s8] sm:$0x1]
  %v2751 = vperm.slane %v2749, 0
  %v2769 = vunpack.c.l.b16 %v2733
  %v2770 = vunpack.c.l.b16 %v2734
  %v2771 = vunpack.c.l.b16 %v2735
  %v2772 = vunpack.c.l.b16 %v2736
  %v2773 = vunpack.c.l.b16 %v2737
  %v2774 = vunpack.c.l.b16 %v2738
  %v2775 = vunpack.c.l.b16 %v2739
  %v2776 = vunpack.c.l.b16 %v2740
  %v2777 = vunpack.c.l.b16 %v2741
  %v2778 = vunpack.c.l.b16 %v2742
  %v2779 = vunpack.c.l.b16 %v2743
  %v2780 = vunpack.c.l.b16 %v2744
  %v2781 = vunpack.c.l.b16 %v2745
  %v2782 = vunpack.c.l.b16 %v2746
  %v2783 = vunpack.c.l.b16 %v2747
  %v2784 = vunpack.c.l.b16 %v2748
  %v2785 = vpack.c.b16 %v2770, %v2769
  %v2786 = vpack.c.b16 %v2772, %v2771
  %v2787 = vpack.c.b16 %v2774, %v2773
  %v2788 = vpack.c.b16 %v2776, %v2775
  %v2789 = vpack.c.b16 %v2778, %v2777
  %v2790 = vpack.c.b16 %v2780, %v2779
  %v2791 = vpack.c.b16 %v2782, %v2781
  %v2792 = vpack.c.b16 %v2784, %v2783
  %2801 = vmatpush.bf16.msra.mxu0 %v2792
  %2802 = vmatpush.bf16.msra.mxu0 %v2791
  %2803 = vmatpush.bf16.msra.mxu0 %v2790
  %2804 = vmatpush.bf16.msra.mxu0 %v2789
  %2805 = vmatpush.bf16.msra.mxu0 %v2788
  %2806 = vmatpush.bf16.msra.mxu0 %v2787
  %2807 = vmatpush.bf16.msra.mxu0 %v2786
  %2808 = vmatpush.bf16.msra.mxu0 %v2785
  %2809 = vmatmul.bf16.gmra.mxu0 %v2732
  %v2810 = vpop.f32.mrf.mxu0
  %v2811 = vadd.f32 %v2751, %v2810
  %v2812 = vpop.f32.mrf.mxu0
  %v2813 = vadd.f32 %v2751, %v2812
  %2814 = vdwg.mxu0
  %2815 = vmax.xlane.f32.xlu0 %v2811
  %v2816 = vpop.xlane.xlu0 %2815
  %2817 = vmax.xlane.f32.xlu0 %v2813
  %v2818 = vpop.xlane.xlu0 %2817
  %v2819 = vsub.f32 %v2811, %v2816
  %v2820 = vsub.f32 %v2813, %v2818
  %v2821 = vmul.f32 %v2819, 1.442695
  %v2822 = vpow.pop %v2821
  %v2823 = vmul.f32 %v2820, 1.442695
  %v2824 = vpow.pop %v2823
  %2825 = vadd.xlane.f32.xlu0 %v2822
  %v2826 = vpop.xlane.xlu0 %2825
  %2827 = vadd.xlane.f32.xlu0 %v2824
  %v2828 = vpop.xlane.xlu0 %2827
  %v2829 = vrcp.pop %v2826
  %v2830 = vmul.f32 %v2826, %v2829
  %v2831 = vsub.f32 1.0, %v2830
  %v2832 = vmul.f32 %v2829, %v2831
  %v2833 = vadd.f32 %v2829, %v2832
  %vm2834 = vweird.f32 %v2826
  %vm2835 = vweird.f32 %v2829
  %vm2836 = vmor %vm2834, %vm2835
  %v2837 = vsel %vm2836, %v2829, %v2833
  %v2838 = vand.u32 2147483647, %v2826
  %vm2839 = vcmp.eq.f32.partialorder %v2838, 8.507059e+37
  %v2840 = vand.u32 %v2826, 2147483648
  %v2841 = vor.u32 1.1754944e-38, %v2840
  %v2842 = vsel %vm2839, %v2841, %v2837
  %v2843 = vrcp.pop %v2828
  %v2844 = vmul.f32 %v2828, %v2843
  %v2845 = vsub.f32 1.0, %v2844
  %v2846 = vmul.f32 %v2843, %v2845
  %v2847 = vadd.f32 %v2843, %v2846
  %vm2848 = vweird.f32 %v2828
  %vm2849 = vweird.f32 %v2843
  %vm2850 = vmor %vm2848, %vm2849
  %v2851 = vsel %vm2850, %v2843, %v2847
  %v2852 = vand.u32 2147483647, %v2828
  %vm2853 = vcmp.eq.f32.partialorder %v2852, 8.507059e+37
  %v2854 = vand.u32 %v2828, 2147483648
  %v2855 = vor.u32 1.1754944e-38, %v2854
  %v2856 = vsel %vm2853, %v2855, %v2851
  %v2857 = vmul.f32 %v2822, %v2842
  %v2858 = vmul.f32 %v2824, %v2856
  %v2859 = vpack.c.bf16 %v2857, %v2857
  %v2860 = vpack.c.bf16 %v2858, %v2858
  %2861 = vst [vmem:[%s9] sm:$0xf] %v2859
  %2862 = vst [vmem:[%s9 + $0x4] sm:$0xf] %v2860
  // Predicated region
  $region38: #{mlp_forward.1} parent=0 // pred_check
    _
  $region39: #{mlp_forward.1} parent=0 // pred_check_branch
    %2864 = sbr.rel (0) target = $region41
  $region40: #{mlp_forward.1} parent=0 // pred_region
    _
  $region41: #{mlp_forward.1} parent=0 // pred_fallthru
    _
  // Predicated region
  $region42: #{mlp_forward.1} parent=0 // pred_check
    _
  $region43: #{mlp_forward.1} parent=0 // pred_check_branch
    %2866 = sbr.rel (0) target = $region45
  $region44: #{mlp_forward.1} parent=0 // pred_region
    _
  $region45: #{mlp_forward.1} parent=0 // pred_fallthru
    _

</llo_original>
